<compile_context>
chip_gen: v7x
topology: tpu7x:2x2x1
jax: 0.10.0
libtpu: 0.0.40
codegen_flags: <defaults>
</compile_context>

<pallas_src>
import functools

import jax
import jax.numpy as jnp
import numpy as np
from jax import lax
from jax.experimental import pallas as pl
from jax.experimental.pallas import tpu as pltpu


def _round_up(x, m):
    return (x + m - 1) // m * m


def _repconv_kernel(xp_ref, w_ref, b_ref, o_ref, *, C):
    """One grid step = one (batch image, output-row tile).

    xp_ref: (1, Hp, WpCp)  zero-padded input; (W, C) folded into lanes, padded to x128
    w_ref:  (K, K, WCp)    merged (large + small, BN-fused) depthwise weights, tiled over W
    b_ref:  (1, WCp)       merged BN bias, tiled over W
    o_ref:  (1, TH, WCp)   output row tile (lane dim = W*C padded to multiple of 128)
    """
    TH, WCp = o_ref.shape[1], o_ref.shape[2]
    WpCp = xp_ref.shape[2]
    K = w_ref.shape[0]

    # First padded input row of this output tile.
    row0 = pl.multiple_of(pl.program_id(1) * TH, TH)

    def kh_body(kh, acc):
        # One aligned, full-width row band per kh tap (read from the ref; no
        # whole-image value materialization).
        band = xp_ref[0, pl.ds(row0 + kh, TH), :]          # (TH, WpCp)
        wrow = w_ref[kh]                                   # (K, WCp): one small load per kh
        for kw in range(K):                                # kw statically unrolled
            # Width shift = lane roll by kw*C on the loaded band (XLU slot);
            # padded junk lanes may wrap but are sliced off in the wrapper.
            src = band if kw == 0 else pltpu.roll(band, shift=WpCp - kw * C, axis=1)
            acc = acc + src[:, :WCp] * wrow[kw]
        return acc

    # fori_loop over kh bounds live ranges (vs. K*K fully-unrolled taps).
    acc = lax.fori_loop(0, K, kh_body, jnp.zeros((TH, WCp), jnp.float32))

    # Single fused bias add (both BN branches merged) + exactly one store per tile.
    o_ref[0] = (acc + b_ref[...]).astype(o_ref.dtype)


@functools.partial(jax.jit, static_argnames=("kernel_size", "small_kernel"))
def reparam_large_kernel_conv(x_nchw, w_large, w_small,
                              scale_l, bias_l, scale_s, bias_s,
                              *, kernel_size, small_kernel):
    """x_nchw: (N, C, H, W) float32.  Returns (N, C, H, W)."""
    N, C, H, W = x_nchw.shape
    K, S = kernel_size, small_kernel
    pad = K // 2
    off = (K - S) // 2

    # ---- merge small branch + both BN affines into one KxK kernel and one bias ----
    wl = jnp.transpose(w_large[:, 0, :, :], (1, 2, 0)).astype(jnp.float32)   # (K, K, C)
    ws = jnp.transpose(w_small[:, 0, :, :], (1, 2, 0)).astype(jnp.float32)   # (S, S, C)
    eq_k = wl * scale_l.reshape(1, 1, C)
    eq_k = eq_k.at[off:off + S, off:off + S, :].add(ws * scale_s.reshape(1, 1, C))
    eq_b = (bias_l + bias_s).reshape(1, C)

    # ---- lane-dense layout: fold (W, C) into the lane dim, pad to multiple of 128 ----
    WC = W * C
    WCp = _round_up(WC, 128)
    Hp, Wp = H + 2 * pad, W + 2 * pad
    WpC = Wp * C
    WpCp = _round_up(WpC, 128)

    x_nhwc = jnp.transpose(x_nchw, (0, 2, 3, 1))
    xp = jnp.pad(x_nhwc, ((0, 0), (pad, pad), (pad, pad), (0, 0)))
    xp_flat = jnp.pad(xp.reshape(N, Hp, WpC), ((0, 0), (0, 0), (0, WpCp - WpC)))

    # Per-tap weight/bias tiled over W so they broadcast directly on the folded lanes.
    w_tiled = jnp.pad(jnp.tile(eq_k, (1, 1, W)), ((0, 0), (0, 0), (0, WCp - WC)))
    b_tiled = jnp.pad(jnp.tile(eq_b, (1, W)), ((0, 0), (0, WCp - WC)))

    # Output row-tile height (register-resident f32 accumulator of (TH, WCp)).
    TH = 8 if H % 8 == 0 else H

    # Explicit VMEM budget: double-buffered blocks + weights + margin, well under
    # half of v7x's 64 MiB.
    in_block_b = Hp * WpCp * 4
    out_block_b = TH * WCp * 4
    w_b = (K * K + 1) * WCp * 4
    vmem_limit = int(min(max(2 * (in_block_b + out_block_b) + 2 * w_b + (2 << 20),
                             4 << 20), 30 << 20))

    out_flat = pl.pallas_call(
        functools.partial(_repconv_kernel, C=C),
        out_shape=jax.ShapeDtypeStruct((N, H, WCp), x_nchw.dtype),
        grid=(N, H // TH),
        in_specs=[
            # Whole padded image resident per n (block index independent of the
            # H-tile axis); rows are sliced with pl.ds inside the kernel.
            pl.BlockSpec((1, Hp, WpCp), lambda n, h: (n, 0, 0)),
            pl.BlockSpec((K, K, WCp), lambda n, h: (0, 0, 0)),
            pl.BlockSpec((1, WCp), lambda n, h: (0, 0)),
        ],
        out_specs=pl.BlockSpec((1, TH, WCp), lambda n, h: (n, h, 0)),
        compiler_params=pltpu.CompilerParams(
            dimension_semantics=("parallel", "parallel"),
            vmem_limit_bytes=vmem_limit),
    )(xp_flat, w_tiled, b_tiled)

    out = out_flat[:, :, :WC].reshape(N, H, W, C)
    return jnp.transpose(out, (0, 3, 1, 2))  # back to NCHW


def _reference(x_nchw, w_large, w_small, scale_l, bias_l, scale_s, bias_s, K, S):
    """Pure-JAX (XLA) reference: depthwise conv + BN affine, per branch."""
    N, C, H, W = x_nchw.shape
    x = jnp.transpose(x_nchw, (0, 2, 3, 1))
    def dwconv(xx, w, k):
        w_hwio = jnp.transpose(w, (2, 3, 1, 0))  # (k, k, 1, C)
        return lax.conv_general_dilated(
            xx, w_hwio, window_strides=(1, 1),
            padding=[(k // 2, k // 2), (k // 2, k // 2)],
            dimension_numbers=("NHWC", "HWIO", "NHWC"),
            feature_group_count=C)
    out = (dwconv(x, w_large, K) * scale_l + bias_l
           + dwconv(x, w_small, S) * scale_s + bias_s)
    return jnp.transpose(out, (0, 3, 1, 2))


if __name__ == "__main__":
    # Module config (depthwise, as in RepLKNet): in=out=groups=C, stride=1.
    N, C, H, W = 2, 4, 16, 16
    K, S = 7, 3           # kernel_size, small_kernel
    eps = 1e-5

    key = jax.random.PRNGKey(0)
    ks = jax.random.split(key, 11)
    x = jax.random.normal(ks[0], (N, C, H, W), jnp.float32)

    # Conv weights: depthwise => shape (out=C, in/groups=1, k, k)
    w_large = jax.random.normal(ks[1], (C, 1, K, K), jnp.float32) * 0.1
    w_small = jax.random.normal(ks[2], (C, 1, S, S), jnp.float32) * 0.1

    # BatchNorm parameters / running stats (large branch and small branch).
    gamma_l = jax.random.uniform(ks[3], (C,), jnp.float32, 0.5, 1.5)
    beta_l = jax.random.normal(ks[4], (C,), jnp.float32) * 0.1
    mean_l = jax.random.normal(ks[5], (C,), jnp.float32) * 0.1
    var_l = jax.random.uniform(ks[6], (C,), jnp.float32, 0.5, 1.5)
    gamma_s = jax.random.uniform(ks[7], (C,), jnp.float32, 0.5, 1.5)
    beta_s = jax.random.normal(ks[8], (C,), jnp.float32) * 0.1
    mean_s = jax.random.normal(ks[9], (C,), jnp.float32) * 0.1
    var_s = jax.random.uniform(ks[10], (C,), jnp.float32, 0.5, 1.5)

    # Fuse BN (inference form) into per-channel scale/bias (parameter glue).
    scale_l = gamma_l / jnp.sqrt(var_l + eps)
    bias_l = beta_l - mean_l * scale_l
    scale_s = gamma_s / jnp.sqrt(var_s + eps)
    bias_s = beta_s - mean_s * scale_s

    out = reparam_large_kernel_conv(
        x, w_large, w_small, scale_l, bias_l, scale_s, bias_s,
        kernel_size=K, small_kernel=S)
    out = jax.block_until_ready(out)

    ref = _reference(x, w_large, w_small, scale_l, bias_l, scale_s, bias_s, K, S)
    np.testing.assert_allclose(np.asarray(out), np.asarray(ref), rtol=1e-4, atol=1e-4)

    print("KERNEL_OK")
</pallas_src>

<mosaic_0001>
module attributes {stable_mosaic.version = 11 : i64} {
  func.func @_repconv_kernel(%arg0: i32, %arg1: i32, %arg2: memref<1x22x128xf32, #tpu.memory_space<vmem>>, %arg3: memref<7x7x128xf32, #tpu.memory_space<vmem>>, %arg4: memref<1x128xf32, #tpu.memory_space<vmem>>, %arg5: memref<1x8x128xf32, #tpu.memory_space<vmem>>) attributes {dimension_semantics = [#tpu.dimension_semantics<parallel>, #tpu.dimension_semantics<parallel>], iteration_bounds = array<i64: 2, 2>, scalar_prefetch = 0 : i64, scratch_operands = 0 : i64, tpu.core_type = #tpu.core_type<tc>, window_params = [{transform_indices = @transform_0, window_bounds = array<i64: 1, 22, 128>}, {pipeline_mode = #tpu.pipeline_mode<synchronous>, transform_indices = @transform_1, window_bounds = array<i64: 7, 7, 128>}, {pipeline_mode = #tpu.pipeline_mode<synchronous>, transform_indices = @transform_2, window_bounds = array<i64: 1, 128>}, {transform_indices = @transform_3, window_bounds = array<i64: 1, 8, 128>}]} {
    %c8_i32 = arith.constant 8 : i32
    %0 = arith.muli %arg1, %c8_i32 : i32
    %1 = tpu.assume_multiple %0, 8 : i32
    %cst = arith.constant 0.000000e+00 : f32
    %2 = vector.broadcast %cst : f32 to vector<8x128xf32>
    %c0_i32 = arith.constant 0 : i32
    %c7_i32 = arith.constant 7 : i32
    %3 = arith.addi %c0_i32, %c7_i32 : i32
    %c1_i32 = arith.constant 1 : i32
    %4 = scf.for %arg6 = %c0_i32 to %3 step %c1_i32 iter_args(%arg7 = %2) -> (vector<8x128xf32>)  : i32 {
      %11 = arith.addi %1, %arg6 : i32
      %c0_5 = arith.constant 0 : index
      %12 = arith.index_cast %11 : i32 to index
      %c0_6 = arith.constant 0 : index
      %13 = vector.load %arg2[%c0_5, %12, %c0_6] : memref<1x22x128xf32, #tpu.memory_space<vmem>>, vector<1x8x128xf32>
      %14 = vector.shape_cast %13 : vector<1x8x128xf32> to vector<8x128xf32>
      %15 = arith.index_cast %arg6 : i32 to index
      %c0_7 = arith.constant 0 : index
      %c0_8 = arith.constant 0 : index
      %16 = vector.load %arg3[%15, %c0_7, %c0_8] : memref<7x7x128xf32, #tpu.memory_space<vmem>>, vector<1x7x128xf32>
      %17 = vector.shape_cast %16 : vector<1x7x128xf32> to vector<7x128xf32>
      %18 = vector.extract_strided_slice %17 {offsets = [0, 0], sizes = [1, 128], strides = [1, 1]} : vector<7x128xf32> to vector<1x128xf32>
      %19 = vector.shape_cast %18 : vector<1x128xf32> to vector<128xf32>
      %20 = vector.shape_cast %19 : vector<128xf32> to vector<1x128xf32>
      %21 = vector.broadcast %20 : vector<1x128xf32> to vector<8x128xf32>
      %22 = arith.mulf %14, %21 : vector<8x128xf32>
      %23 = arith.addf %arg7, %22 : vector<8x128xf32>
      %c124_i32 = arith.constant 124 : i32
      %24 = tpu.dynamic_rotate %14 by %c124_i32 dim 1 : vector<8x128xf32>, i32 -> vector<8x128xf32>
      %25 = vector.extract_strided_slice %17 {offsets = [1, 0], sizes = [1, 128], strides = [1, 1]} : vector<7x128xf32> to vector<1x128xf32>
      %26 = vector.shape_cast %25 : vector<1x128xf32> to vector<128xf32>
      %27 = vector.shape_cast %26 : vector<128xf32> to vector<1x128xf32>
      %28 = vector.broadcast %27 : vector<1x128xf32> to vector<8x128xf32>
      %29 = arith.mulf %24, %28 : vector<8x128xf32>
      %30 = arith.addf %23, %29 : vector<8x128xf32>
      %c120_i32 = arith.constant 120 : i32
      %31 = tpu.dynamic_rotate %14 by %c120_i32 dim 1 : vector<8x128xf32>, i32 -> vector<8x128xf32>
      %32 = vector.extract_strided_slice %17 {offsets = [2, 0], sizes = [1, 128], strides = [1, 1]} : vector<7x128xf32> to vector<1x128xf32>
      %33 = vector.shape_cast %32 : vector<1x128xf32> to vector<128xf32>
      %34 = vector.shape_cast %33 : vector<128xf32> to vector<1x128xf32>
      %35 = vector.broadcast %34 : vector<1x128xf32> to vector<8x128xf32>
      %36 = arith.mulf %31, %35 : vector<8x128xf32>
      %37 = arith.addf %30, %36 : vector<8x128xf32>
      %c116_i32 = arith.constant 116 : i32
      %38 = tpu.dynamic_rotate %14 by %c116_i32 dim 1 : vector<8x128xf32>, i32 -> vector<8x128xf32>
      %39 = vector.extract_strided_slice %17 {offsets = [3, 0], sizes = [1, 128], strides = [1, 1]} : vector<7x128xf32> to vector<1x128xf32>
      %40 = vector.shape_cast %39 : vector<1x128xf32> to vector<128xf32>
      %41 = vector.shape_cast %40 : vector<128xf32> to vector<1x128xf32>
      %42 = vector.broadcast %41 : vector<1x128xf32> to vector<8x128xf32>
      %43 = arith.mulf %38, %42 : vector<8x128xf32>
      %44 = arith.addf %37, %43 : vector<8x128xf32>
      %c112_i32 = arith.constant 112 : i32
      %45 = tpu.dynamic_rotate %14 by %c112_i32 dim 1 : vector<8x128xf32>, i32 -> vector<8x128xf32>
      %46 = vector.extract_strided_slice %17 {offsets = [4, 0], sizes = [1, 128], strides = [1, 1]} : vector<7x128xf32> to vector<1x128xf32>
      %47 = vector.shape_cast %46 : vector<1x128xf32> to vector<128xf32>
      %48 = vector.shape_cast %47 : vector<128xf32> to vector<1x128xf32>
      %49 = vector.broadcast %48 : vector<1x128xf32> to vector<8x128xf32>
      %50 = arith.mulf %45, %49 : vector<8x128xf32>
      %51 = arith.addf %44, %50 : vector<8x128xf32>
      %c108_i32 = arith.constant 108 : i32
      %52 = tpu.dynamic_rotate %14 by %c108_i32 dim 1 : vector<8x128xf32>, i32 -> vector<8x128xf32>
      %53 = vector.extract_strided_slice %17 {offsets = [5, 0], sizes = [1, 128], strides = [1, 1]} : vector<7x128xf32> to vector<1x128xf32>
      %54 = vector.shape_cast %53 : vector<1x128xf32> to vector<128xf32>
      %55 = vector.shape_cast %54 : vector<128xf32> to vector<1x128xf32>
      %56 = vector.broadcast %55 : vector<1x128xf32> to vector<8x128xf32>
      %57 = arith.mulf %52, %56 : vector<8x128xf32>
      %58 = arith.addf %51, %57 : vector<8x128xf32>
      %c104_i32 = arith.constant 104 : i32
      %59 = tpu.dynamic_rotate %14 by %c104_i32 dim 1 : vector<8x128xf32>, i32 -> vector<8x128xf32>
      %60 = vector.extract_strided_slice %17 {offsets = [6, 0], sizes = [1, 128], strides = [1, 1]} : vector<7x128xf32> to vector<1x128xf32>
      %61 = vector.shape_cast %60 : vector<1x128xf32> to vector<128xf32>
      %62 = vector.shape_cast %61 : vector<128xf32> to vector<1x128xf32>
      %63 = vector.broadcast %62 : vector<1x128xf32> to vector<8x128xf32>
      %64 = arith.mulf %59, %63 : vector<8x128xf32>
      %65 = arith.addf %58, %64 : vector<8x128xf32>
      scf.yield %65 : vector<8x128xf32>
    }
    %c7_i32_0 = arith.constant 7 : i32
    %c0 = arith.constant 0 : index
    %c0_1 = arith.constant 0 : index
    %5 = vector.load %arg4[%c0, %c0_1] : memref<1x128xf32, #tpu.memory_space<vmem>>, vector<1x128xf32>
    %6 = vector.broadcast %5 : vector<1x128xf32> to vector<8x128xf32>
    %7 = arith.addf %4, %6 : vector<8x128xf32>
    %c0_2 = arith.constant 0 : index
    %c0_3 = arith.constant 0 : index
    %c0_4 = arith.constant 0 : index
    %8 = vector.load %arg5[%c0_2, %c0_3, %c0_4] : memref<1x8x128xf32, #tpu.memory_space<vmem>>, vector<1x8x128xf32>
    %9 = vector.shape_cast %8 : vector<1x8x128xf32> to vector<8x128xf32>
    %10 = vector.shape_cast %7 : vector<8x128xf32> to vector<1x8x128xf32>
    tpu.vector_store %arg5[%c0_2, %c0_3, %c0_4], %10 {strides = array<i32>} : memref<1x8x128xf32, #tpu.memory_space<vmem>>, vector<1x8x128xf32>,
    return
  }
  func.func @transform_0(%arg0: i32, %arg1: i32) -> (i32, i32, i32) {
    %c0_i32 = arith.constant 0 : i32
    %c0_i32_0 = arith.constant 0 : i32
    %c0_i32_1 = arith.constant 0 : i32
    return %arg0, %c0_i32, %c0_i32_0 : i32, i32, i32
  }
  func.func @transform_1(%arg0: i32, %arg1: i32) -> (i32, i32, i32) {
    %c0_i32 = arith.constant 0 : i32
    %c0_i32_0 = arith.constant 0 : i32
    %c0_i32_1 = arith.constant 0 : i32
    %c0_i32_2 = arith.constant 0 : i32
    return %c0_i32, %c0_i32_0, %c0_i32_1 : i32, i32, i32
  }
  func.func @transform_2(%arg0: i32, %arg1: i32) -> (i32, i32) {
    %c0_i32 = arith.constant 0 : i32
    %c0_i32_0 = arith.constant 0 : i32
    %c0_i32_1 = arith.constant 0 : i32
    return %c0_i32, %c0_i32_0 : i32, i32
  }
  func.func @transform_3(%arg0: i32, %arg1: i32) -> (i32, i32, i32) {
    %c0_i32 = arith.constant 0 : i32
    %c0_i32_0 = arith.constant 0 : i32
    return %arg0, %arg1, %c0_i32 : i32, i32, i32
  }
}

</mosaic_0001>

<llo_original>
// kernel: tile.13
$region0: #{tile.13}
  %s0 = inlined_call_operand.vmem [shape: f32[7,7,16,4], index: 0, kind: input, shape index: {}]
  %s1 = inlined_call_operand.vmem [shape: f32[7,7,64], index: 1, kind: output, shape index: {}]
  %s2 = smov 3
  %v3 = vld [vmem:[%s0] ss:$16 sm:%s2]
  %s4 = smov 12
  %v5 = vld [vmem:[%s0] ss:$16 sm:%s4]
  %vm6 = vcmask 1043458
  %v7 = vsel %vm6, %v5, %v3
  %s8 = smov 48
  %v9 = vld [vmem:[%s0] ss:$16 sm:%s8]
  %vm10 = vcmask 1045508
  %v11 = vsel %vm10, %v9, %v7
  %s12 = smov 192
  %v13 = vld [vmem:[%s0] ss:$16 sm:%s12]
  %vm14 = vcmask 1047558
  %v15 = vsel %vm14, %v13, %v11
  %vm16 = vcmask 31744
  %17 = vst.msk [vmem:[%s1] sm:$0x7f] %vm16, %v15
  %s18 = scalar_lea.vmem %s1, 1
  %19 = vst.msk [vmem:[%s18] sm:$0x80] %vm16, %v15
  %s20 = scalar_lea.vmem %s0, 128
  %s21 = smov 3
  %v22 = vld [vmem:[%s20] ss:$16 sm:%s21]
  %s23 = scalar_lea.vmem %s0, 128
  %s24 = smov 12
  %v25 = vld [vmem:[%s23] ss:$16 sm:%s24]
  %vm26 = vcmask 1043458
  %v27 = vsel %vm26, %v25, %v22
  %s28 = scalar_lea.vmem %s0, 128
  %s29 = smov 48
  %v30 = vld [vmem:[%s28] ss:$16 sm:%s29]
  %vm31 = vcmask 1045508
  %v32 = vsel %vm31, %v30, %v27
  %s33 = scalar_lea.vmem %s0, 128
  %s34 = smov 192
  %v35 = vld [vmem:[%s33] ss:$16 sm:%s34]
  %vm36 = vcmask 1047558
  %v37 = vsel %vm36, %v35, %v32
  %vm38 = vcmask 31744
  %s39 = scalar_lea.vmem %s1, 9
  %40 = vst.msk [vmem:[%s39] sm:$0x3f] %vm38, %v37
  %s41 = scalar_lea.vmem %s1, 10
  %42 = vst.msk [vmem:[%s41] sm:$0xc0] %vm38, %v37
  %s43 = scalar_lea.vmem %s0, 256
  %s44 = smov 3
  %v45 = vld [vmem:[%s43] ss:$16 sm:%s44]
  %s46 = scalar_lea.vmem %s0, 256
  %s47 = smov 12
  %v48 = vld [vmem:[%s46] ss:$16 sm:%s47]
  %vm49 = vcmask 1043458
  %v50 = vsel %vm49, %v48, %v45
  %s51 = scalar_lea.vmem %s0, 256
  %s52 = smov 48
  %v53 = vld [vmem:[%s51] ss:$16 sm:%s52]
  %vm54 = vcmask 1045508
  %v55 = vsel %vm54, %v53, %v50
  %s56 = scalar_lea.vmem %s0, 256
  %s57 = smov 192
  %v58 = vld [vmem:[%s56] ss:$16 sm:%s57]
  %vm59 = vcmask 1047558
  %v60 = vsel %vm59, %v58, %v55
  %vm61 = vcmask 31744
  %s62 = scalar_lea.vmem %s1, 18
  %63 = vst.msk [vmem:[%s62] sm:$0x1f] %vm61, %v60
  %s64 = scalar_lea.vmem %s1, 19
  %65 = vst.msk [vmem:[%s64] sm:$0xe0] %vm61, %v60
  %s66 = scalar_lea.vmem %s0, 384
  %s67 = smov 3
  %v68 = vld [vmem:[%s66] ss:$16 sm:%s67]
  %s69 = scalar_lea.vmem %s0, 384
  %s70 = smov 12
  %v71 = vld [vmem:[%s69] ss:$16 sm:%s70]
  %vm72 = vcmask 1043458
  %v73 = vsel %vm72, %v71, %v68
  %s74 = scalar_lea.vmem %s0, 384
  %s75 = smov 48
  %v76 = vld [vmem:[%s74] ss:$16 sm:%s75]
  %vm77 = vcmask 1045508
  %v78 = vsel %vm77, %v76, %v73
  %s79 = scalar_lea.vmem %s0, 384
  %s80 = smov 192
  %v81 = vld [vmem:[%s79] ss:$16 sm:%s80]
  %vm82 = vcmask 1047558
  %v83 = vsel %vm82, %v81, %v78
  %vm84 = vcmask 31744
  %s85 = scalar_lea.vmem %s1, 27
  %86 = vst.msk [vmem:[%s85] sm:$0xf] %vm84, %v83
  %s87 = scalar_lea.vmem %s1, 28
  %88 = vst.msk [vmem:[%s87] sm:$0xf0] %vm84, %v83
  %s89 = scalar_lea.vmem %s0, 512
  %s90 = smov 3
  %v91 = vld [vmem:[%s89] ss:$16 sm:%s90]
  %s92 = scalar_lea.vmem %s0, 512
  %s93 = smov 12
  %v94 = vld [vmem:[%s92] ss:$16 sm:%s93]
  %vm95 = vcmask 1043458
  %v96 = vsel %vm95, %v94, %v91
  %s97 = scalar_lea.vmem %s0, 512
  %s98 = smov 48
  %v99 = vld [vmem:[%s97] ss:$16 sm:%s98]
  %vm100 = vcmask 1045508
  %v101 = vsel %vm100, %v99, %v96
  %s102 = scalar_lea.vmem %s0, 512
  %s103 = smov 192
  %v104 = vld [vmem:[%s102] ss:$16 sm:%s103]
  %vm105 = vcmask 1047558
  %v106 = vsel %vm105, %v104, %v101
  %vm107 = vcmask 31744
  %s108 = scalar_lea.vmem %s1, 36
  %109 = vst.msk [vmem:[%s108] sm:$0x7] %vm107, %v106
  %s110 = scalar_lea.vmem %s1, 37
  %111 = vst.msk [vmem:[%s110] sm:$0xf8] %vm107, %v106
  %s112 = scalar_lea.vmem %s0, 640
  %s113 = smov 3
  %v114 = vld [vmem:[%s112] ss:$16 sm:%s113]
  %s115 = scalar_lea.vmem %s0, 640
  %s116 = smov 12
  %v117 = vld [vmem:[%s115] ss:$16 sm:%s116]
  %vm118 = vcmask 1043458
  %v119 = vsel %vm118, %v117, %v114
  %s120 = scalar_lea.vmem %s0, 640
  %s121 = smov 48
  %v122 = vld [vmem:[%s120] ss:$16 sm:%s121]
  %vm123 = vcmask 1045508
  %v124 = vsel %vm123, %v122, %v119
  %s125 = scalar_lea.vmem %s0, 640
  %s126 = smov 192
  %v127 = vld [vmem:[%s125] ss:$16 sm:%s126]
  %vm128 = vcmask 1047558
  %v129 = vsel %vm128, %v127, %v124
  %vm130 = vcmask 31744
  %s131 = scalar_lea.vmem %s1, 45
  %132 = vst.msk [vmem:[%s131] sm:$0x3] %vm130, %v129
  %s133 = scalar_lea.vmem %s1, 46
  %134 = vst.msk [vmem:[%s133] sm:$0xfc] %vm130, %v129
  %s135 = scalar_lea.vmem %s0, 768
  %v136 = vld [vmem:[%s135] sm:$0x1]
  %vm137 = vcmask 31744
  %s138 = scalar_lea.vmem %s1, 54
  %139 = vst.msk [vmem:[%s138] sm:$0x1] %vm137, %v136
  %s140 = scalar_lea.vmem %s0, 15
  %s141 = smov 3
  %v142 = vld [vmem:[%s140] ss:$16 sm:%s141]
  %s143 = scalar_lea.vmem %s0, 15
  %s144 = smov 12
  %v145 = vld [vmem:[%s143] ss:$16 sm:%s144]
  %vm146 = vcmask 1043458
  %v147 = vsel %vm146, %v145, %v142
  %s148 = scalar_lea.vmem %s0, 15
  %s149 = smov 48
  %v150 = vld [vmem:[%s148] ss:$16 sm:%s149]
  %vm151 = vcmask 1045508
  %v152 = vsel %vm151, %v150, %v147
  %s153 = scalar_lea.vmem %s0, 15
  %s154 = smov 192
  %v155 = vld [vmem:[%s153] ss:$16 sm:%s154]
  %vm156 = vcmask 1047558
  %v157 = vsel %vm156, %v155, %v152
  %158 = vrot.lane.b32.xlu0 %v157, 60
  %v159 = vpop.permute.xlu0 %158
  %vm160 = vcmask 523744
  %161 = vst.msk [vmem:[%s1] sm:$0x7f] %vm160, %v159
  %s162 = scalar_lea.vmem %s1, 1
  %163 = vst.msk [vmem:[%s162] sm:$0x80] %vm160, %v159
  %s164 = scalar_lea.vmem %s0, 463
  %s165 = smov 3
  %v166 = vld [vmem:[%s164] ss:$16 sm:%s165]
  %s167 = scalar_lea.vmem %s0, 463
  %s168 = smov 12
  %v169 = vld [vmem:[%s167] ss:$16 sm:%s168]
  %vm170 = vcmask 1043458
  %v171 = vsel %vm170, %v169, %v166
  %s172 = scalar_lea.vmem %s0, 463
  %s173 = smov 48
  %v174 = vld [vmem:[%s172] ss:$16 sm:%s173]
  %vm175 = vcmask 1045508
  %v176 = vsel %vm175, %v174, %v171
  %s177 = scalar_lea.vmem %s0, 463
  %s178 = smov 192
  %v179 = vld [vmem:[%s177] ss:$16 sm:%s178]
  %vm180 = vcmask 1047558
  %v181 = vsel %vm180, %v179, %v176
  %182 = vrot.lane.b32.xlu0 %v181, 60
  %v183 = vpop.permute.xlu0 %182
  %vm184 = vcmask 523744
  %s185 = scalar_lea.vmem %s1, 32
  %186 = vst.msk [vmem:[%s185] sm:$0x7f] %vm184, %v183
  %s187 = scalar_lea.vmem %s1, 33
  %188 = vst.msk [vmem:[%s187] sm:$0x80] %vm184, %v183
  %s189 = scalar_lea.vmem %s0, 143
  %s190 = smov 3
  %v191 = vld [vmem:[%s189] ss:$16 sm:%s190]
  %s192 = scalar_lea.vmem %s0, 143
  %s193 = smov 12
  %v194 = vld [vmem:[%s192] ss:$16 sm:%s193]
  %vm195 = vcmask 1043458
  %v196 = vsel %vm195, %v194, %v191
  %s197 = scalar_lea.vmem %s0, 143
  %s198 = smov 48
  %v199 = vld [vmem:[%s197] ss:$16 sm:%s198]
  %vm200 = vcmask 1045508
  %v201 = vsel %vm200, %v199, %v196
  %s202 = scalar_lea.vmem %s0, 143
  %s203 = smov 192
  %v204 = vld [vmem:[%s202] ss:$16 sm:%s203]
  %vm205 = vcmask 1047558
  %v206 = vsel %vm205, %v204, %v201
  %207 = vrot.lane.b32.xlu0 %v206, 60
  %v208 = vpop.permute.xlu0 %207
  %vm209 = vcmask 523744
  %s210 = scalar_lea.vmem %s1, 9
  %211 = vst.msk [vmem:[%s210] sm:$0x3f] %vm209, %v208
  %s212 = scalar_lea.vmem %s1, 10
  %213 = vst.msk [vmem:[%s212] sm:$0xc0] %vm209, %v208
  %s214 = scalar_lea.vmem %s0, 591
  %s215 = smov 3
  %v216 = vld [vmem:[%s214] ss:$16 sm:%s215]
  %s217 = scalar_lea.vmem %s0, 591
  %s218 = smov 12
  %v219 = vld [vmem:[%s217] ss:$16 sm:%s218]
  %vm220 = vcmask 1043458
  %v221 = vsel %vm220, %v219, %v216
  %s222 = scalar_lea.vmem %s0, 591
  %s223 = smov 48
  %v224 = vld [vmem:[%s222] ss:$16 sm:%s223]
  %vm225 = vcmask 1045508
  %v226 = vsel %vm225, %v224, %v221
  %s227 = scalar_lea.vmem %s0, 591
  %s228 = smov 192
  %v229 = vld [vmem:[%s227] ss:$16 sm:%s228]
  %vm230 = vcmask 1047558
  %v231 = vsel %vm230, %v229, %v226
  %232 = vrot.lane.b32.xlu0 %v231, 60
  %v233 = vpop.permute.xlu0 %232
  %vm234 = vcmask 523744
  %s235 = scalar_lea.vmem %s1, 41
  %236 = vst.msk [vmem:[%s235] sm:$0x3f] %vm234, %v233
  %s237 = scalar_lea.vmem %s1, 42
  %238 = vst.msk [vmem:[%s237] sm:$0xc0] %vm234, %v233
  %s239 = scalar_lea.vmem %s0, 271
  %s240 = smov 3
  %v241 = vld [vmem:[%s239] ss:$16 sm:%s240]
  %s242 = scalar_lea.vmem %s0, 271
  %s243 = smov 12
  %v244 = vld [vmem:[%s242] ss:$16 sm:%s243]
  %vm245 = vcmask 1043458
  %v246 = vsel %vm245, %v244, %v241
  %s247 = scalar_lea.vmem %s0, 271
  %s248 = smov 48
  %v249 = vld [vmem:[%s247] ss:$16 sm:%s248]
  %vm250 = vcmask 1045508
  %v251 = vsel %vm250, %v249, %v246
  %s252 = scalar_lea.vmem %s0, 271
  %s253 = smov 192
  %v254 = vld [vmem:[%s252] ss:$16 sm:%s253]
  %vm255 = vcmask 1047558
  %v256 = vsel %vm255, %v254, %v251
  %257 = vrot.lane.b32.xlu0 %v256, 60
  %v258 = vpop.permute.xlu0 %257
  %vm259 = vcmask 523744
  %s260 = scalar_lea.vmem %s1, 18
  %261 = vst.msk [vmem:[%s260] sm:$0x1f] %vm259, %v258
  %s262 = scalar_lea.vmem %s1, 19
  %263 = vst.msk [vmem:[%s262] sm:$0xe0] %vm259, %v258
  %s264 = scalar_lea.vmem %s0, 719
  %s265 = smov 3
  %v266 = vld [vmem:[%s264] ss:$16 sm:%s265]
  %s267 = scalar_lea.vmem %s0, 719
  %s268 = smov 12
  %v269 = vld [vmem:[%s267] ss:$16 sm:%s268]
  %vm270 = vcmask 1043458
  %v271 = vsel %vm270, %v269, %v266
  %s272 = scalar_lea.vmem %s0, 779
  %v273 = vld [vmem:[%s272] sm:$0x10]
  %vm274 = vcmask 1044484
  %v275 = vsel %vm274, %v273, %v271
  %s276 = scalar_lea.vmem %s0, 319
  %s277 = smov 96
  %v278 = vld [vmem:[%s276] ss:$16 sm:%s277]
  %vm279 = vcmask 1046533
  %v280 = vsel %vm279, %v278, %v275
  %s281 = scalar_lea.vmem %s0, 424
  %v282 = vld [vmem:[%s281] sm:$0x80]
  %vm283 = vcmask 1047559
  %v284 = vsel %vm283, %v282, %v280
  %285 = vrot.lane.b32.xlu0 %v284, 60
  %v286 = vpop.permute.xlu0 %285
  %vm287 = vcmask 523744
  %s288 = scalar_lea.vmem %s1, 50
  %289 = vst.msk [vmem:[%s288] sm:$0x1f] %vm287, %v286
  %s290 = scalar_lea.vmem %s1, 22
  %291 = vst.msk [vmem:[%s290] sm:$0xe0] %vm287, %v286
  %s292 = scalar_lea.vmem %s0, 447
  %v293 = vld [vmem:[%s292] sm:$0x1]
  %294 = vrot.lane.b32.xlu0 %v293, 60
  %v295 = vpop.permute.xlu0 %294
  %vm296 = vcmask 523744
  %s297 = scalar_lea.vmem %s1, 30
  %298 = vst.msk [vmem:[%s297] sm:$0x1] %vm296, %v295
  %s299 = scalar_lea.vmem %s0, 14
  %s300 = smov 3
  %v301 = vld [vmem:[%s299] ss:$16 sm:%s300]
  %s302 = scalar_lea.vmem %s0, 14
  %s303 = smov 12
  %v304 = vld [vmem:[%s302] ss:$16 sm:%s303]
  %vm305 = vcmask 1043458
  %v306 = vsel %vm305, %v304, %v301
  %s307 = scalar_lea.vmem %s0, 14
  %s308 = smov 48
  %v309 = vld [vmem:[%s307] ss:$16 sm:%s308]
  %vm310 = vcmask 1045508
  %v311 = vsel %vm310, %v309, %v306
  %s312 = scalar_lea.vmem %s0, 14
  %s313 = smov 192
  %v314 = vld [vmem:[%s312] ss:$16 sm:%s313]
  %vm315 = vcmask 1047558
  %v316 = vsel %vm315, %v314, %v311
  %317 = vrot.lane.b32.xlu0 %v316, 56
  %v318 = vpop.permute.xlu0 %317
  %vm319 = vcmask 490944
  %320 = vst.msk [vmem:[%s1] sm:$0x7f] %vm319, %v318
  %s321 = scalar_lea.vmem %s1, 1
  %322 = vst.msk [vmem:[%s321] sm:$0x80] %vm319, %v318
  %s323 = scalar_lea.vmem %s0, 462
  %s324 = smov 3
  %v325 = vld [vmem:[%s323] ss:$16 sm:%s324]
  %s326 = scalar_lea.vmem %s0, 462
  %s327 = smov 12
  %v328 = vld [vmem:[%s326] ss:$16 sm:%s327]
  %vm329 = vcmask 1043458
  %v330 = vsel %vm329, %v328, %v325
  %s331 = scalar_lea.vmem %s0, 462
  %s332 = smov 48
  %v333 = vld [vmem:[%s331] ss:$16 sm:%s332]
  %vm334 = vcmask 1045508
  %v335 = vsel %vm334, %v333, %v330
  %s336 = scalar_lea.vmem %s0, 462
  %s337 = smov 192
  %v338 = vld [vmem:[%s336] ss:$16 sm:%s337]
  %vm339 = vcmask 1047558
  %v340 = vsel %vm339, %v338, %v335
  %341 = vrot.lane.b32.xlu0 %v340, 56
  %v342 = vpop.permute.xlu0 %341
  %vm343 = vcmask 490944
  %s344 = scalar_lea.vmem %s1, 32
  %345 = vst.msk [vmem:[%s344] sm:$0x7f] %vm343, %v342
  %s346 = scalar_lea.vmem %s1, 33
  %347 = vst.msk [vmem:[%s346] sm:$0x80] %vm343, %v342
  %s348 = scalar_lea.vmem %s0, 142
  %s349 = smov 3
  %v350 = vld [vmem:[%s348] ss:$16 sm:%s349]
  %s351 = scalar_lea.vmem %s0, 142
  %s352 = smov 12
  %v353 = vld [vmem:[%s351] ss:$16 sm:%s352]
  %vm354 = vcmask 1043458
  %v355 = vsel %vm354, %v353, %v350
  %s356 = scalar_lea.vmem %s0, 142
  %s357 = smov 48
  %v358 = vld [vmem:[%s356] ss:$16 sm:%s357]
  %vm359 = vcmask 1045508
  %v360 = vsel %vm359, %v358, %v355
  %s361 = scalar_lea.vmem %s0, 142
  %s362 = smov 192
  %v363 = vld [vmem:[%s361] ss:$16 sm:%s362]
  %vm364 = vcmask 1047558
  %v365 = vsel %vm364, %v363, %v360
  %366 = vrot.lane.b32.xlu0 %v365, 56
  %v367 = vpop.permute.xlu0 %366
  %vm368 = vcmask 490944
  %s369 = scalar_lea.vmem %s1, 9
  %370 = vst.msk [vmem:[%s369] sm:$0x3f] %vm368, %v367
  %s371 = scalar_lea.vmem %s1, 10
  %372 = vst.msk [vmem:[%s371] sm:$0xc0] %vm368, %v367
  %s373 = scalar_lea.vmem %s0, 590
  %s374 = smov 3
  %v375 = vld [vmem:[%s373] ss:$16 sm:%s374]
  %s376 = scalar_lea.vmem %s0, 590
  %s377 = smov 12
  %v378 = vld [vmem:[%s376] ss:$16 sm:%s377]
  %vm379 = vcmask 1043458
  %v380 = vsel %vm379, %v378, %v375
  %s381 = scalar_lea.vmem %s0, 590
  %s382 = smov 48
  %v383 = vld [vmem:[%s381] ss:$16 sm:%s382]
  %vm384 = vcmask 1045508
  %v385 = vsel %vm384, %v383, %v380
  %s386 = scalar_lea.vmem %s0, 590
  %s387 = smov 192
  %v388 = vld [vmem:[%s386] ss:$16 sm:%s387]
  %vm389 = vcmask 1047558
  %v390 = vsel %vm389, %v388, %v385
  %391 = vrot.lane.b32.xlu0 %v390, 56
  %v392 = vpop.permute.xlu0 %391
  %vm393 = vcmask 490944
  %s394 = scalar_lea.vmem %s1, 41
  %395 = vst.msk [vmem:[%s394] sm:$0x3f] %vm393, %v392
  %s396 = scalar_lea.vmem %s1, 42
  %397 = vst.msk [vmem:[%s396] sm:$0xc0] %vm393, %v392
  %s398 = scalar_lea.vmem %s0, 270
  %s399 = smov 3
  %v400 = vld [vmem:[%s398] ss:$16 sm:%s399]
  %s401 = scalar_lea.vmem %s0, 270
  %s402 = smov 12
  %v403 = vld [vmem:[%s401] ss:$16 sm:%s402]
  %vm404 = vcmask 1043458
  %v405 = vsel %vm404, %v403, %v400
  %s406 = scalar_lea.vmem %s0, 270
  %s407 = smov 48
  %v408 = vld [vmem:[%s406] ss:$16 sm:%s407]
  %vm409 = vcmask 1045508
  %v410 = vsel %vm409, %v408, %v405
  %s411 = scalar_lea.vmem %s0, 270
  %s412 = smov 192
  %v413 = vld [vmem:[%s411] ss:$16 sm:%s412]
  %vm414 = vcmask 1047558
  %v415 = vsel %vm414, %v413, %v410
  %416 = vrot.lane.b32.xlu0 %v415, 56
  %v417 = vpop.permute.xlu0 %416
  %vm418 = vcmask 490944
  %s419 = scalar_lea.vmem %s1, 18
  %420 = vst.msk [vmem:[%s419] sm:$0x1f] %vm418, %v417
  %s421 = scalar_lea.vmem %s1, 19
  %422 = vst.msk [vmem:[%s421] sm:$0xe0] %vm418, %v417
  %s423 = scalar_lea.vmem %s0, 718
  %s424 = smov 3
  %v425 = vld [vmem:[%s423] ss:$16 sm:%s424]
  %s426 = scalar_lea.vmem %s0, 718
  %s427 = smov 12
  %v428 = vld [vmem:[%s426] ss:$16 sm:%s427]
  %vm429 = vcmask 1043458
  %v430 = vsel %vm429, %v428, %v425
  %s431 = scalar_lea.vmem %s0, 778
  %v432 = vld [vmem:[%s431] sm:$0x10]
  %vm433 = vcmask 1044484
  %v434 = vsel %vm433, %v432, %v430
  %s435 = scalar_lea.vmem %s0, 318
  %s436 = smov 96
  %v437 = vld [vmem:[%s435] ss:$16 sm:%s436]
  %vm438 = vcmask 1046533
  %v439 = vsel %vm438, %v437, %v434
  %s440 = scalar_lea.vmem %s0, 423
  %v441 = vld [vmem:[%s440] sm:$0x80]
  %vm442 = vcmask 1047559
  %v443 = vsel %vm442, %v441, %v439
  %444 = vrot.lane.b32.xlu0 %v443, 56
  %v445 = vpop.permute.xlu0 %444
  %vm446 = vcmask 490944
  %s447 = scalar_lea.vmem %s1, 50
  %448 = vst.msk [vmem:[%s447] sm:$0x1f] %vm446, %v445
  %s449 = scalar_lea.vmem %s1, 22
  %450 = vst.msk [vmem:[%s449] sm:$0xe0] %vm446, %v445
  %s451 = scalar_lea.vmem %s0, 446
  %v452 = vld [vmem:[%s451] sm:$0x1]
  %453 = vrot.lane.b32.xlu0 %v452, 56
  %v454 = vpop.permute.xlu0 %453
  %vm455 = vcmask 490944
  %s456 = scalar_lea.vmem %s1, 30
  %457 = vst.msk [vmem:[%s456] sm:$0x1] %vm455, %v454
  %s458 = scalar_lea.vmem %s0, 13
  %s459 = smov 3
  %v460 = vld [vmem:[%s458] ss:$16 sm:%s459]
  %s461 = scalar_lea.vmem %s0, 13
  %s462 = smov 12
  %v463 = vld [vmem:[%s461] ss:$16 sm:%s462]
  %vm464 = vcmask 1043458
  %v465 = vsel %vm464, %v463, %v460
  %s466 = scalar_lea.vmem %s0, 13
  %s467 = smov 48
  %v468 = vld [vmem:[%s466] ss:$16 sm:%s467]
  %vm469 = vcmask 1045508
  %v470 = vsel %vm469, %v468, %v465
  %s471 = scalar_lea.vmem %s0, 13
  %s472 = smov 192
  %v473 = vld [vmem:[%s471] ss:$16 sm:%s472]
  %vm474 = vcmask 1047558
  %v475 = vsel %vm474, %v473, %v470
  %476 = vrot.lane.b32.xlu0 %v475, 52
  %v477 = vpop.permute.xlu0 %476
  %vm478 = vcmask 458144
  %479 = vst.msk [vmem:[%s1] sm:$0x7f] %vm478, %v477
  %s480 = scalar_lea.vmem %s1, 1
  %481 = vst.msk [vmem:[%s480] sm:$0x80] %vm478, %v477
  %s482 = scalar_lea.vmem %s0, 461
  %s483 = smov 3
  %v484 = vld [vmem:[%s482] ss:$16 sm:%s483]
  %s485 = scalar_lea.vmem %s0, 461
  %s486 = smov 12
  %v487 = vld [vmem:[%s485] ss:$16 sm:%s486]
  %vm488 = vcmask 1043458
  %v489 = vsel %vm488, %v487, %v484
  %s490 = scalar_lea.vmem %s0, 461
  %s491 = smov 48
  %v492 = vld [vmem:[%s490] ss:$16 sm:%s491]
  %vm493 = vcmask 1045508
  %v494 = vsel %vm493, %v492, %v489
  %s495 = scalar_lea.vmem %s0, 461
  %s496 = smov 192
  %v497 = vld [vmem:[%s495] ss:$16 sm:%s496]
  %vm498 = vcmask 1047558
  %v499 = vsel %vm498, %v497, %v494
  %500 = vrot.lane.b32.xlu0 %v499, 52
  %v501 = vpop.permute.xlu0 %500
  %vm502 = vcmask 458144
  %s503 = scalar_lea.vmem %s1, 32
  %504 = vst.msk [vmem:[%s503] sm:$0x7f] %vm502, %v501
  %s505 = scalar_lea.vmem %s1, 33
  %506 = vst.msk [vmem:[%s505] sm:$0x80] %vm502, %v501
  %s507 = scalar_lea.vmem %s0, 141
  %s508 = smov 3
  %v509 = vld [vmem:[%s507] ss:$16 sm:%s508]
  %s510 = scalar_lea.vmem %s0, 141
  %s511 = smov 12
  %v512 = vld [vmem:[%s510] ss:$16 sm:%s511]
  %vm513 = vcmask 1043458
  %v514 = vsel %vm513, %v512, %v509
  %s515 = scalar_lea.vmem %s0, 141
  %s516 = smov 48
  %v517 = vld [vmem:[%s515] ss:$16 sm:%s516]
  %vm518 = vcmask 1045508
  %v519 = vsel %vm518, %v517, %v514
  %s520 = scalar_lea.vmem %s0, 141
  %s521 = smov 192
  %v522 = vld [vmem:[%s520] ss:$16 sm:%s521]
  %vm523 = vcmask 1047558
  %v524 = vsel %vm523, %v522, %v519
  %525 = vrot.lane.b32.xlu0 %v524, 52
  %v526 = vpop.permute.xlu0 %525
  %vm527 = vcmask 458144
  %s528 = scalar_lea.vmem %s1, 9
  %529 = vst.msk [vmem:[%s528] sm:$0x3f] %vm527, %v526
  %s530 = scalar_lea.vmem %s1, 10
  %531 = vst.msk [vmem:[%s530] sm:$0xc0] %vm527, %v526
  %s532 = scalar_lea.vmem %s0, 589
  %s533 = smov 3
  %v534 = vld [vmem:[%s532] ss:$16 sm:%s533]
  %s535 = scalar_lea.vmem %s0, 589
  %s536 = smov 12
  %v537 = vld [vmem:[%s535] ss:$16 sm:%s536]
  %vm538 = vcmask 1043458
  %v539 = vsel %vm538, %v537, %v534
  %s540 = scalar_lea.vmem %s0, 589
  %s541 = smov 48
  %v542 = vld [vmem:[%s540] ss:$16 sm:%s541]
  %vm543 = vcmask 1045508
  %v544 = vsel %vm543, %v542, %v539
  %s545 = scalar_lea.vmem %s0, 589
  %s546 = smov 192
  %v547 = vld [vmem:[%s545] ss:$16 sm:%s546]
  %vm548 = vcmask 1047558
  %v549 = vsel %vm548, %v547, %v544
  %550 = vrot.lane.b32.xlu0 %v549, 52
  %v551 = vpop.permute.xlu0 %550
  %vm552 = vcmask 458144
  %s553 = scalar_lea.vmem %s1, 41
  %554 = vst.msk [vmem:[%s553] sm:$0x3f] %vm552, %v551
  %s555 = scalar_lea.vmem %s1, 42
  %556 = vst.msk [vmem:[%s555] sm:$0xc0] %vm552, %v551
  %s557 = scalar_lea.vmem %s0, 269
  %s558 = smov 3
  %v559 = vld [vmem:[%s557] ss:$16 sm:%s558]
  %s560 = scalar_lea.vmem %s0, 269
  %s561 = smov 12
  %v562 = vld [vmem:[%s560] ss:$16 sm:%s561]
  %vm563 = vcmask 1043458
  %v564 = vsel %vm563, %v562, %v559
  %s565 = scalar_lea.vmem %s0, 269
  %s566 = smov 48
  %v567 = vld [vmem:[%s565] ss:$16 sm:%s566]
  %vm568 = vcmask 1045508
  %v569 = vsel %vm568, %v567, %v564
  %s570 = scalar_lea.vmem %s0, 269
  %s571 = smov 192
  %v572 = vld [vmem:[%s570] ss:$16 sm:%s571]
  %vm573 = vcmask 1047558
  %v574 = vsel %vm573, %v572, %v569
  %575 = vrot.lane.b32.xlu0 %v574, 52
  %v576 = vpop.permute.xlu0 %575
  %vm577 = vcmask 458144
  %s578 = scalar_lea.vmem %s1, 18
  %579 = vst.msk [vmem:[%s578] sm:$0x1f] %vm577, %v576
  %s580 = scalar_lea.vmem %s1, 19
  %581 = vst.msk [vmem:[%s580] sm:$0xe0] %vm577, %v576
  %s582 = scalar_lea.vmem %s0, 717
  %s583 = smov 3
  %v584 = vld [vmem:[%s582] ss:$16 sm:%s583]
  %s585 = scalar_lea.vmem %s0, 717
  %s586 = smov 12
  %v587 = vld [vmem:[%s585] ss:$16 sm:%s586]
  %vm588 = vcmask 1043458
  %v589 = vsel %vm588, %v587, %v584
  %s590 = scalar_lea.vmem %s0, 777
  %v591 = vld [vmem:[%s590] sm:$0x10]
  %vm592 = vcmask 1044484
  %v593 = vsel %vm592, %v591, %v589
  %s594 = scalar_lea.vmem %s0, 317
  %s595 = smov 96
  %v596 = vld [vmem:[%s594] ss:$16 sm:%s595]
  %vm597 = vcmask 1046533
  %v598 = vsel %vm597, %v596, %v593
  %s599 = scalar_lea.vmem %s0, 422
  %v600 = vld [vmem:[%s599] sm:$0x80]
  %vm601 = vcmask 1047559
  %v602 = vsel %vm601, %v600, %v598
  %603 = vrot.lane.b32.xlu0 %v602, 52
  %v604 = vpop.permute.xlu0 %603
  %vm605 = vcmask 458144
  %s606 = scalar_lea.vmem %s1, 50
  %607 = vst.msk [vmem:[%s606] sm:$0x1f] %vm605, %v604
  %s608 = scalar_lea.vmem %s1, 22
  %609 = vst.msk [vmem:[%s608] sm:$0xe0] %vm605, %v604
  %s610 = scalar_lea.vmem %s0, 445
  %v611 = vld [vmem:[%s610] sm:$0x1]
  %612 = vrot.lane.b32.xlu0 %v611, 52
  %v613 = vpop.permute.xlu0 %612
  %vm614 = vcmask 458144
  %s615 = scalar_lea.vmem %s1, 30
  %616 = vst.msk [vmem:[%s615] sm:$0x1] %vm614, %v613
  %s617 = scalar_lea.vmem %s0, 12
  %s618 = smov 3
  %v619 = vld [vmem:[%s617] ss:$16 sm:%s618]
  %s620 = scalar_lea.vmem %s0, 12
  %s621 = smov 12
  %v622 = vld [vmem:[%s620] ss:$16 sm:%s621]
  %vm623 = vcmask 1043458
  %v624 = vsel %vm623, %v622, %v619
  %s625 = scalar_lea.vmem %s0, 12
  %s626 = smov 48
  %v627 = vld [vmem:[%s625] ss:$16 sm:%s626]
  %vm628 = vcmask 1045508
  %v629 = vsel %vm628, %v627, %v624
  %s630 = scalar_lea.vmem %s0, 12
  %s631 = smov 192
  %v632 = vld [vmem:[%s630] ss:$16 sm:%s631]
  %vm633 = vcmask 1047558
  %v634 = vsel %vm633, %v632, %v629
  %635 = vrot.lane.b32.xlu0 %v634, 48
  %v636 = vpop.permute.xlu0 %635
  %vm637 = vcmask 425344
  %638 = vst.msk [vmem:[%s1] sm:$0x7f] %vm637, %v636
  %s639 = scalar_lea.vmem %s1, 1
  %640 = vst.msk [vmem:[%s639] sm:$0x80] %vm637, %v636
  %s641 = scalar_lea.vmem %s0, 460
  %s642 = smov 3
  %v643 = vld [vmem:[%s641] ss:$16 sm:%s642]
  %s644 = scalar_lea.vmem %s0, 460
  %s645 = smov 12
  %v646 = vld [vmem:[%s644] ss:$16 sm:%s645]
  %vm647 = vcmask 1043458
  %v648 = vsel %vm647, %v646, %v643
  %s649 = scalar_lea.vmem %s0, 460
  %s650 = smov 48
  %v651 = vld [vmem:[%s649] ss:$16 sm:%s650]
  %vm652 = vcmask 1045508
  %v653 = vsel %vm652, %v651, %v648
  %s654 = scalar_lea.vmem %s0, 460
  %s655 = smov 192
  %v656 = vld [vmem:[%s654] ss:$16 sm:%s655]
  %vm657 = vcmask 1047558
  %v658 = vsel %vm657, %v656, %v653
  %659 = vrot.lane.b32.xlu0 %v658, 48
  %v660 = vpop.permute.xlu0 %659
  %vm661 = vcmask 425344
  %s662 = scalar_lea.vmem %s1, 32
  %663 = vst.msk [vmem:[%s662] sm:$0x7f] %vm661, %v660
  %s664 = scalar_lea.vmem %s1, 33
  %665 = vst.msk [vmem:[%s664] sm:$0x80] %vm661, %v660
  %s666 = scalar_lea.vmem %s0, 140
  %s667 = smov 3
  %v668 = vld [vmem:[%s666] ss:$16 sm:%s667]
  %s669 = scalar_lea.vmem %s0, 140
  %s670 = smov 12
  %v671 = vld [vmem:[%s669] ss:$16 sm:%s670]
  %vm672 = vcmask 1043458
  %v673 = vsel %vm672, %v671, %v668
  %s674 = scalar_lea.vmem %s0, 140
  %s675 = smov 48
  %v676 = vld [vmem:[%s674] ss:$16 sm:%s675]
  %vm677 = vcmask 1045508
  %v678 = vsel %vm677, %v676, %v673
  %s679 = scalar_lea.vmem %s0, 140
  %s680 = smov 192
  %v681 = vld [vmem:[%s679] ss:$16 sm:%s680]
  %vm682 = vcmask 1047558
  %v683 = vsel %vm682, %v681, %v678
  %684 = vrot.lane.b32.xlu0 %v683, 48
  %v685 = vpop.permute.xlu0 %684
  %vm686 = vcmask 425344
  %s687 = scalar_lea.vmem %s1, 9
  %688 = vst.msk [vmem:[%s687] sm:$0x3f] %vm686, %v685
  %s689 = scalar_lea.vmem %s1, 10
  %690 = vst.msk [vmem:[%s689] sm:$0xc0] %vm686, %v685
  %s691 = scalar_lea.vmem %s0, 588
  %s692 = smov 3
  %v693 = vld [vmem:[%s691] ss:$16 sm:%s692]
  %s694 = scalar_lea.vmem %s0, 588
  %s695 = smov 12
  %v696 = vld [vmem:[%s694] ss:$16 sm:%s695]
  %vm697 = vcmask 1043458
  %v698 = vsel %vm697, %v696, %v693
  %s699 = scalar_lea.vmem %s0, 588
  %s700 = smov 48
  %v701 = vld [vmem:[%s699] ss:$16 sm:%s700]
  %vm702 = vcmask 1045508
  %v703 = vsel %vm702, %v701, %v698
  %s704 = scalar_lea.vmem %s0, 588
  %s705 = smov 192
  %v706 = vld [vmem:[%s704] ss:$16 sm:%s705]
  %vm707 = vcmask 1047558
  %v708 = vsel %vm707, %v706, %v703
  %709 = vrot.lane.b32.xlu0 %v708, 48
  %v710 = vpop.permute.xlu0 %709
  %vm711 = vcmask 425344
  %s712 = scalar_lea.vmem %s1, 41
  %713 = vst.msk [vmem:[%s712] sm:$0x3f] %vm711, %v710
  %s714 = scalar_lea.vmem %s1, 42
  %715 = vst.msk [vmem:[%s714] sm:$0xc0] %vm711, %v710
  %s716 = scalar_lea.vmem %s0, 268
  %s717 = smov 3
  %v718 = vld [vmem:[%s716] ss:$16 sm:%s717]
  %s719 = scalar_lea.vmem %s0, 268
  %s720 = smov 12
  %v721 = vld [vmem:[%s719] ss:$16 sm:%s720]
  %vm722 = vcmask 1043458
  %v723 = vsel %vm722, %v721, %v718
  %s724 = scalar_lea.vmem %s0, 268
  %s725 = smov 48
  %v726 = vld [vmem:[%s724] ss:$16 sm:%s725]
  %vm727 = vcmask 1045508
  %v728 = vsel %vm727, %v726, %v723
  %s729 = scalar_lea.vmem %s0, 268
  %s730 = smov 192
  %v731 = vld [vmem:[%s729] ss:$16 sm:%s730]
  %vm732 = vcmask 1047558
  %v733 = vsel %vm732, %v731, %v728
  %734 = vrot.lane.b32.xlu0 %v733, 48
  %v735 = vpop.permute.xlu0 %734
  %vm736 = vcmask 425344
  %s737 = scalar_lea.vmem %s1, 18
  %738 = vst.msk [vmem:[%s737] sm:$0x1f] %vm736, %v735
  %s739 = scalar_lea.vmem %s1, 19
  %740 = vst.msk [vmem:[%s739] sm:$0xe0] %vm736, %v735
  %s741 = scalar_lea.vmem %s0, 716
  %s742 = smov 3
  %v743 = vld [vmem:[%s741] ss:$16 sm:%s742]
  %s744 = scalar_lea.vmem %s0, 716
  %s745 = smov 12
  %v746 = vld [vmem:[%s744] ss:$16 sm:%s745]
  %vm747 = vcmask 1043458
  %v748 = vsel %vm747, %v746, %v743
  %s749 = scalar_lea.vmem %s0, 776
  %v750 = vld [vmem:[%s749] sm:$0x10]
  %vm751 = vcmask 1044484
  %v752 = vsel %vm751, %v750, %v748
  %s753 = scalar_lea.vmem %s0, 316
  %s754 = smov 96
  %v755 = vld [vmem:[%s753] ss:$16 sm:%s754]
  %vm756 = vcmask 1046533
  %v757 = vsel %vm756, %v755, %v752
  %s758 = scalar_lea.vmem %s0, 421
  %v759 = vld [vmem:[%s758] sm:$0x80]
  %vm760 = vcmask 1047559
  %v761 = vsel %vm760, %v759, %v757
  %762 = vrot.lane.b32.xlu0 %v761, 48
  %v763 = vpop.permute.xlu0 %762
  %vm764 = vcmask 425344
  %s765 = scalar_lea.vmem %s1, 50
  %766 = vst.msk [vmem:[%s765] sm:$0x1f] %vm764, %v763
  %s767 = scalar_lea.vmem %s1, 22
  %768 = vst.msk [vmem:[%s767] sm:$0xe0] %vm764, %v763
  %s769 = scalar_lea.vmem %s0, 444
  %v770 = vld [vmem:[%s769] sm:$0x1]
  %771 = vrot.lane.b32.xlu0 %v770, 48
  %v772 = vpop.permute.xlu0 %771
  %vm773 = vcmask 425344
  %s774 = scalar_lea.vmem %s1, 30
  %775 = vst.msk [vmem:[%s774] sm:$0x1] %vm773, %v772
  %s776 = scalar_lea.vmem %s0, 11
  %s777 = smov 3
  %v778 = vld [vmem:[%s776] ss:$16 sm:%s777]
  %s779 = scalar_lea.vmem %s0, 11
  %s780 = smov 12
  %v781 = vld [vmem:[%s779] ss:$16 sm:%s780]
  %vm782 = vcmask 1043458
  %v783 = vsel %vm782, %v781, %v778
  %s784 = scalar_lea.vmem %s0, 11
  %s785 = smov 48
  %v786 = vld [vmem:[%s784] ss:$16 sm:%s785]
  %vm787 = vcmask 1045508
  %v788 = vsel %vm787, %v786, %v783
  %s789 = scalar_lea.vmem %s0, 11
  %s790 = smov 192
  %v791 = vld [vmem:[%s789] ss:$16 sm:%s790]
  %vm792 = vcmask 1047558
  %v793 = vsel %vm792, %v791, %v788
  %794 = vrot.lane.b32.xlu0 %v793, 44
  %v795 = vpop.permute.xlu0 %794
  %vm796 = vcmask 392544
  %797 = vst.msk [vmem:[%s1] sm:$0x7f] %vm796, %v795
  %s798 = scalar_lea.vmem %s1, 1
  %799 = vst.msk [vmem:[%s798] sm:$0x80] %vm796, %v795
  %s800 = scalar_lea.vmem %s0, 459
  %s801 = smov 3
  %v802 = vld [vmem:[%s800] ss:$16 sm:%s801]
  %s803 = scalar_lea.vmem %s0, 459
  %s804 = smov 12
  %v805 = vld [vmem:[%s803] ss:$16 sm:%s804]
  %vm806 = vcmask 1043458
  %v807 = vsel %vm806, %v805, %v802
  %s808 = scalar_lea.vmem %s0, 459
  %s809 = smov 48
  %v810 = vld [vmem:[%s808] ss:$16 sm:%s809]
  %vm811 = vcmask 1045508
  %v812 = vsel %vm811, %v810, %v807
  %s813 = scalar_lea.vmem %s0, 459
  %s814 = smov 192
  %v815 = vld [vmem:[%s813] ss:$16 sm:%s814]
  %vm816 = vcmask 1047558
  %v817 = vsel %vm816, %v815, %v812
  %818 = vrot.lane.b32.xlu0 %v817, 44
  %v819 = vpop.permute.xlu0 %818
  %vm820 = vcmask 392544
  %s821 = scalar_lea.vmem %s1, 32
  %822 = vst.msk [vmem:[%s821] sm:$0x7f] %vm820, %v819
  %s823 = scalar_lea.vmem %s1, 33
  %824 = vst.msk [vmem:[%s823] sm:$0x80] %vm820, %v819
  %s825 = scalar_lea.vmem %s0, 139
  %s826 = smov 3
  %v827 = vld [vmem:[%s825] ss:$16 sm:%s826]
  %s828 = scalar_lea.vmem %s0, 139
  %s829 = smov 12
  %v830 = vld [vmem:[%s828] ss:$16 sm:%s829]
  %vm831 = vcmask 1043458
  %v832 = vsel %vm831, %v830, %v827
  %s833 = scalar_lea.vmem %s0, 139
  %s834 = smov 48
  %v835 = vld [vmem:[%s833] ss:$16 sm:%s834]
  %vm836 = vcmask 1045508
  %v837 = vsel %vm836, %v835, %v832
  %s838 = scalar_lea.vmem %s0, 139
  %s839 = smov 192
  %v840 = vld [vmem:[%s838] ss:$16 sm:%s839]
  %vm841 = vcmask 1047558
  %v842 = vsel %vm841, %v840, %v837
  %843 = vrot.lane.b32.xlu0 %v842, 44
  %v844 = vpop.permute.xlu0 %843
  %vm845 = vcmask 392544
  %s846 = scalar_lea.vmem %s1, 9
  %847 = vst.msk [vmem:[%s846] sm:$0x3f] %vm845, %v844
  %s848 = scalar_lea.vmem %s1, 10
  %849 = vst.msk [vmem:[%s848] sm:$0xc0] %vm845, %v844
  %s850 = scalar_lea.vmem %s0, 587
  %s851 = smov 3
  %v852 = vld [vmem:[%s850] ss:$16 sm:%s851]
  %s853 = scalar_lea.vmem %s0, 587
  %s854 = smov 12
  %v855 = vld [vmem:[%s853] ss:$16 sm:%s854]
  %vm856 = vcmask 1043458
  %v857 = vsel %vm856, %v855, %v852
  %s858 = scalar_lea.vmem %s0, 587
  %s859 = smov 48
  %v860 = vld [vmem:[%s858] ss:$16 sm:%s859]
  %vm861 = vcmask 1045508
  %v862 = vsel %vm861, %v860, %v857
  %s863 = scalar_lea.vmem %s0, 587
  %s864 = smov 192
  %v865 = vld [vmem:[%s863] ss:$16 sm:%s864]
  %vm866 = vcmask 1047558
  %v867 = vsel %vm866, %v865, %v862
  %868 = vrot.lane.b32.xlu0 %v867, 44
  %v869 = vpop.permute.xlu0 %868
  %vm870 = vcmask 392544
  %s871 = scalar_lea.vmem %s1, 41
  %872 = vst.msk [vmem:[%s871] sm:$0x3f] %vm870, %v869
  %s873 = scalar_lea.vmem %s1, 42
  %874 = vst.msk [vmem:[%s873] sm:$0xc0] %vm870, %v869
  %s875 = scalar_lea.vmem %s0, 267
  %s876 = smov 3
  %v877 = vld [vmem:[%s875] ss:$16 sm:%s876]
  %s878 = scalar_lea.vmem %s0, 267
  %s879 = smov 12
  %v880 = vld [vmem:[%s878] ss:$16 sm:%s879]
  %vm881 = vcmask 1043458
  %v882 = vsel %vm881, %v880, %v877
  %s883 = scalar_lea.vmem %s0, 267
  %s884 = smov 48
  %v885 = vld [vmem:[%s883] ss:$16 sm:%s884]
  %vm886 = vcmask 1045508
  %v887 = vsel %vm886, %v885, %v882
  %s888 = scalar_lea.vmem %s0, 267
  %s889 = smov 192
  %v890 = vld [vmem:[%s888] ss:$16 sm:%s889]
  %vm891 = vcmask 1047558
  %v892 = vsel %vm891, %v890, %v887
  %893 = vrot.lane.b32.xlu0 %v892, 44
  %v894 = vpop.permute.xlu0 %893
  %vm895 = vcmask 392544
  %s896 = scalar_lea.vmem %s1, 18
  %897 = vst.msk [vmem:[%s896] sm:$0x1f] %vm895, %v894
  %s898 = scalar_lea.vmem %s1, 19
  %899 = vst.msk [vmem:[%s898] sm:$0xe0] %vm895, %v894
  %s900 = scalar_lea.vmem %s0, 715
  %s901 = smov 3
  %v902 = vld [vmem:[%s900] ss:$16 sm:%s901]
  %s903 = scalar_lea.vmem %s0, 715
  %s904 = smov 12
  %v905 = vld [vmem:[%s903] ss:$16 sm:%s904]
  %vm906 = vcmask 1043458
  %v907 = vsel %vm906, %v905, %v902
  %s908 = scalar_lea.vmem %s0, 775
  %v909 = vld [vmem:[%s908] sm:$0x10]
  %vm910 = vcmask 1044484
  %v911 = vsel %vm910, %v909, %v907
  %s912 = scalar_lea.vmem %s0, 315
  %s913 = smov 96
  %v914 = vld [vmem:[%s912] ss:$16 sm:%s913]
  %vm915 = vcmask 1046533
  %v916 = vsel %vm915, %v914, %v911
  %s917 = scalar_lea.vmem %s0, 420
  %v918 = vld [vmem:[%s917] sm:$0x80]
  %vm919 = vcmask 1047559
  %v920 = vsel %vm919, %v918, %v916
  %921 = vrot.lane.b32.xlu0 %v920, 44
  %v922 = vpop.permute.xlu0 %921
  %vm923 = vcmask 392544
  %s924 = scalar_lea.vmem %s1, 50
  %925 = vst.msk [vmem:[%s924] sm:$0x1f] %vm923, %v922
  %s926 = scalar_lea.vmem %s1, 22
  %927 = vst.msk [vmem:[%s926] sm:$0xe0] %vm923, %v922
  %s928 = scalar_lea.vmem %s0, 443
  %v929 = vld [vmem:[%s928] sm:$0x1]
  %930 = vrot.lane.b32.xlu0 %v929, 44
  %v931 = vpop.permute.xlu0 %930
  %vm932 = vcmask 392544
  %s933 = scalar_lea.vmem %s1, 30
  %934 = vst.msk [vmem:[%s933] sm:$0x1] %vm932, %v931
  %s935 = scalar_lea.vmem %s0, 10
  %s936 = smov 3
  %v937 = vld [vmem:[%s935] ss:$16 sm:%s936]
  %s938 = scalar_lea.vmem %s0, 10
  %s939 = smov 12
  %v940 = vld [vmem:[%s938] ss:$16 sm:%s939]
  %vm941 = vcmask 1043458
  %v942 = vsel %vm941, %v940, %v937
  %s943 = scalar_lea.vmem %s0, 10
  %s944 = smov 48
  %v945 = vld [vmem:[%s943] ss:$16 sm:%s944]
  %vm946 = vcmask 1045508
  %v947 = vsel %vm946, %v945, %v942
  %s948 = scalar_lea.vmem %s0, 10
  %s949 = smov 192
  %v950 = vld [vmem:[%s948] ss:$16 sm:%s949]
  %vm951 = vcmask 1047558
  %v952 = vsel %vm951, %v950, %v947
  %953 = vrot.lane.b32.xlu0 %v952, 40
  %v954 = vpop.permute.xlu0 %953
  %vm955 = vcmask 359744
  %956 = vst.msk [vmem:[%s1] sm:$0x7f] %vm955, %v954
  %s957 = scalar_lea.vmem %s1, 1
  %958 = vst.msk [vmem:[%s957] sm:$0x80] %vm955, %v954
  %s959 = scalar_lea.vmem %s0, 458
  %s960 = smov 3
  %v961 = vld [vmem:[%s959] ss:$16 sm:%s960]
  %s962 = scalar_lea.vmem %s0, 458
  %s963 = smov 12
  %v964 = vld [vmem:[%s962] ss:$16 sm:%s963]
  %vm965 = vcmask 1043458
  %v966 = vsel %vm965, %v964, %v961
  %s967 = scalar_lea.vmem %s0, 458
  %s968 = smov 48
  %v969 = vld [vmem:[%s967] ss:$16 sm:%s968]
  %vm970 = vcmask 1045508
  %v971 = vsel %vm970, %v969, %v966
  %s972 = scalar_lea.vmem %s0, 458
  %s973 = smov 192
  %v974 = vld [vmem:[%s972] ss:$16 sm:%s973]
  %vm975 = vcmask 1047558
  %v976 = vsel %vm975, %v974, %v971
  %977 = vrot.lane.b32.xlu0 %v976, 40
  %v978 = vpop.permute.xlu0 %977
  %vm979 = vcmask 359744
  %s980 = scalar_lea.vmem %s1, 32
  %981 = vst.msk [vmem:[%s980] sm:$0x7f] %vm979, %v978
  %s982 = scalar_lea.vmem %s1, 33
  %983 = vst.msk [vmem:[%s982] sm:$0x80] %vm979, %v978
  %s984 = scalar_lea.vmem %s0, 138
  %s985 = smov 3
  %v986 = vld [vmem:[%s984] ss:$16 sm:%s985]
  %s987 = scalar_lea.vmem %s0, 138
  %s988 = smov 12
  %v989 = vld [vmem:[%s987] ss:$16 sm:%s988]
  %vm990 = vcmask 1043458
  %v991 = vsel %vm990, %v989, %v986
  %s992 = scalar_lea.vmem %s0, 138
  %s993 = smov 48
  %v994 = vld [vmem:[%s992] ss:$16 sm:%s993]
  %vm995 = vcmask 1045508
  %v996 = vsel %vm995, %v994, %v991
  %s997 = scalar_lea.vmem %s0, 138
  %s998 = smov 192
  %v999 = vld [vmem:[%s997] ss:$16 sm:%s998]
  %vm1000 = vcmask 1047558
  %v1001 = vsel %vm1000, %v999, %v996
  %1002 = vrot.lane.b32.xlu0 %v1001, 40
  %v1003 = vpop.permute.xlu0 %1002
  %vm1004 = vcmask 359744
  %s1005 = scalar_lea.vmem %s1, 9
  %1006 = vst.msk [vmem:[%s1005] sm:$0x3f] %vm1004, %v1003
  %s1007 = scalar_lea.vmem %s1, 10
  %1008 = vst.msk [vmem:[%s1007] sm:$0xc0] %vm1004, %v1003
  %s1009 = scalar_lea.vmem %s0, 586
  %s1010 = smov 3
  %v1011 = vld [vmem:[%s1009] ss:$16 sm:%s1010]
  %s1012 = scalar_lea.vmem %s0, 586
  %s1013 = smov 12
  %v1014 = vld [vmem:[%s1012] ss:$16 sm:%s1013]
  %vm1015 = vcmask 1043458
  %v1016 = vsel %vm1015, %v1014, %v1011
  %s1017 = scalar_lea.vmem %s0, 586
  %s1018 = smov 48
  %v1019 = vld [vmem:[%s1017] ss:$16 sm:%s1018]
  %vm1020 = vcmask 1045508
  %v1021 = vsel %vm1020, %v1019, %v1016
  %s1022 = scalar_lea.vmem %s0, 586
  %s1023 = smov 192
  %v1024 = vld [vmem:[%s1022] ss:$16 sm:%s1023]
  %vm1025 = vcmask 1047558
  %v1026 = vsel %vm1025, %v1024, %v1021
  %1027 = vrot.lane.b32.xlu0 %v1026, 40
  %v1028 = vpop.permute.xlu0 %1027
  %vm1029 = vcmask 359744
  %s1030 = scalar_lea.vmem %s1, 41
  %1031 = vst.msk [vmem:[%s1030] sm:$0x3f] %vm1029, %v1028
  %s1032 = scalar_lea.vmem %s1, 42
  %1033 = vst.msk [vmem:[%s1032] sm:$0xc0] %vm1029, %v1028
  %s1034 = scalar_lea.vmem %s0, 266
  %s1035 = smov 3
  %v1036 = vld [vmem:[%s1034] ss:$16 sm:%s1035]
  %s1037 = scalar_lea.vmem %s0, 266
  %s1038 = smov 12
  %v1039 = vld [vmem:[%s1037] ss:$16 sm:%s1038]
  %vm1040 = vcmask 1043458
  %v1041 = vsel %vm1040, %v1039, %v1036
  %s1042 = scalar_lea.vmem %s0, 266
  %s1043 = smov 48
  %v1044 = vld [vmem:[%s1042] ss:$16 sm:%s1043]
  %vm1045 = vcmask 1045508
  %v1046 = vsel %vm1045, %v1044, %v1041
  %s1047 = scalar_lea.vmem %s0, 266
  %s1048 = smov 192
  %v1049 = vld [vmem:[%s1047] ss:$16 sm:%s1048]
  %vm1050 = vcmask 1047558
  %v1051 = vsel %vm1050, %v1049, %v1046
  %1052 = vrot.lane.b32.xlu0 %v1051, 40
  %v1053 = vpop.permute.xlu0 %1052
  %vm1054 = vcmask 359744
  %s1055 = scalar_lea.vmem %s1, 18
  %1056 = vst.msk [vmem:[%s1055] sm:$0x1f] %vm1054, %v1053
  %s1057 = scalar_lea.vmem %s1, 19
  %1058 = vst.msk [vmem:[%s1057] sm:$0xe0] %vm1054, %v1053
  %s1059 = scalar_lea.vmem %s0, 714
  %s1060 = smov 3
  %v1061 = vld [vmem:[%s1059] ss:$16 sm:%s1060]
  %s1062 = scalar_lea.vmem %s0, 714
  %s1063 = smov 12
  %v1064 = vld [vmem:[%s1062] ss:$16 sm:%s1063]
  %vm1065 = vcmask 1043458
  %v1066 = vsel %vm1065, %v1064, %v1061
  %s1067 = scalar_lea.vmem %s0, 774
  %v1068 = vld [vmem:[%s1067] sm:$0x10]
  %vm1069 = vcmask 1044484
  %v1070 = vsel %vm1069, %v1068, %v1066
  %s1071 = scalar_lea.vmem %s0, 314
  %s1072 = smov 96
  %v1073 = vld [vmem:[%s1071] ss:$16 sm:%s1072]
  %vm1074 = vcmask 1046533
  %v1075 = vsel %vm1074, %v1073, %v1070
  %s1076 = scalar_lea.vmem %s0, 419
  %v1077 = vld [vmem:[%s1076] sm:$0x80]
  %vm1078 = vcmask 1047559
  %v1079 = vsel %vm1078, %v1077, %v1075
  %1080 = vrot.lane.b32.xlu0 %v1079, 40
  %v1081 = vpop.permute.xlu0 %1080
  %vm1082 = vcmask 359744
  %s1083 = scalar_lea.vmem %s1, 50
  %1084 = vst.msk [vmem:[%s1083] sm:$0x1f] %vm1082, %v1081
  %s1085 = scalar_lea.vmem %s1, 22
  %1086 = vst.msk [vmem:[%s1085] sm:$0xe0] %vm1082, %v1081
  %s1087 = scalar_lea.vmem %s0, 442
  %v1088 = vld [vmem:[%s1087] sm:$0x1]
  %1089 = vrot.lane.b32.xlu0 %v1088, 40
  %v1090 = vpop.permute.xlu0 %1089
  %vm1091 = vcmask 359744
  %s1092 = scalar_lea.vmem %s1, 30
  %1093 = vst.msk [vmem:[%s1092] sm:$0x1] %vm1091, %v1090
  %s1094 = scalar_lea.vmem %s0, 9
  %s1095 = smov 3
  %v1096 = vld [vmem:[%s1094] ss:$16 sm:%s1095]
  %s1097 = scalar_lea.vmem %s0, 9
  %s1098 = smov 12
  %v1099 = vld [vmem:[%s1097] ss:$16 sm:%s1098]
  %vm1100 = vcmask 1043458
  %v1101 = vsel %vm1100, %v1099, %v1096
  %s1102 = scalar_lea.vmem %s0, 9
  %s1103 = smov 48
  %v1104 = vld [vmem:[%s1102] ss:$16 sm:%s1103]
  %vm1105 = vcmask 1045508
  %v1106 = vsel %vm1105, %v1104, %v1101
  %s1107 = scalar_lea.vmem %s0, 9
  %s1108 = smov 192
  %v1109 = vld [vmem:[%s1107] ss:$16 sm:%s1108]
  %vm1110 = vcmask 1047558
  %v1111 = vsel %vm1110, %v1109, %v1106
  %1112 = vrot.lane.b32.xlu0 %v1111, 36
  %v1113 = vpop.permute.xlu0 %1112
  %vm1114 = vcmask 326944
  %1115 = vst.msk [vmem:[%s1] sm:$0x7f] %vm1114, %v1113
  %s1116 = scalar_lea.vmem %s1, 1
  %1117 = vst.msk [vmem:[%s1116] sm:$0x80] %vm1114, %v1113
  %s1118 = scalar_lea.vmem %s0, 457
  %s1119 = smov 3
  %v1120 = vld [vmem:[%s1118] ss:$16 sm:%s1119]
  %s1121 = scalar_lea.vmem %s0, 457
  %s1122 = smov 12
  %v1123 = vld [vmem:[%s1121] ss:$16 sm:%s1122]
  %vm1124 = vcmask 1043458
  %v1125 = vsel %vm1124, %v1123, %v1120
  %s1126 = scalar_lea.vmem %s0, 457
  %s1127 = smov 48
  %v1128 = vld [vmem:[%s1126] ss:$16 sm:%s1127]
  %vm1129 = vcmask 1045508
  %v1130 = vsel %vm1129, %v1128, %v1125
  %s1131 = scalar_lea.vmem %s0, 457
  %s1132 = smov 192
  %v1133 = vld [vmem:[%s1131] ss:$16 sm:%s1132]
  %vm1134 = vcmask 1047558
  %v1135 = vsel %vm1134, %v1133, %v1130
  %1136 = vrot.lane.b32.xlu0 %v1135, 36
  %v1137 = vpop.permute.xlu0 %1136
  %vm1138 = vcmask 326944
  %s1139 = scalar_lea.vmem %s1, 32
  %1140 = vst.msk [vmem:[%s1139] sm:$0x7f] %vm1138, %v1137
  %s1141 = scalar_lea.vmem %s1, 33
  %1142 = vst.msk [vmem:[%s1141] sm:$0x80] %vm1138, %v1137
  %s1143 = scalar_lea.vmem %s0, 137
  %s1144 = smov 3
  %v1145 = vld [vmem:[%s1143] ss:$16 sm:%s1144]
  %s1146 = scalar_lea.vmem %s0, 137
  %s1147 = smov 12
  %v1148 = vld [vmem:[%s1146] ss:$16 sm:%s1147]
  %vm1149 = vcmask 1043458
  %v1150 = vsel %vm1149, %v1148, %v1145
  %s1151 = scalar_lea.vmem %s0, 137
  %s1152 = smov 48
  %v1153 = vld [vmem:[%s1151] ss:$16 sm:%s1152]
  %vm1154 = vcmask 1045508
  %v1155 = vsel %vm1154, %v1153, %v1150
  %s1156 = scalar_lea.vmem %s0, 137
  %s1157 = smov 192
  %v1158 = vld [vmem:[%s1156] ss:$16 sm:%s1157]
  %vm1159 = vcmask 1047558
  %v1160 = vsel %vm1159, %v1158, %v1155
  %1161 = vrot.lane.b32.xlu0 %v1160, 36
  %v1162 = vpop.permute.xlu0 %1161
  %vm1163 = vcmask 326944
  %s1164 = scalar_lea.vmem %s1, 9
  %1165 = vst.msk [vmem:[%s1164] sm:$0x3f] %vm1163, %v1162
  %s1166 = scalar_lea.vmem %s1, 10
  %1167 = vst.msk [vmem:[%s1166] sm:$0xc0] %vm1163, %v1162
  %s1168 = scalar_lea.vmem %s0, 585
  %s1169 = smov 3
  %v1170 = vld [vmem:[%s1168] ss:$16 sm:%s1169]
  %s1171 = scalar_lea.vmem %s0, 585
  %s1172 = smov 12
  %v1173 = vld [vmem:[%s1171] ss:$16 sm:%s1172]
  %vm1174 = vcmask 1043458
  %v1175 = vsel %vm1174, %v1173, %v1170
  %s1176 = scalar_lea.vmem %s0, 585
  %s1177 = smov 48
  %v1178 = vld [vmem:[%s1176] ss:$16 sm:%s1177]
  %vm1179 = vcmask 1045508
  %v1180 = vsel %vm1179, %v1178, %v1175
  %s1181 = scalar_lea.vmem %s0, 585
  %s1182 = smov 192
  %v1183 = vld [vmem:[%s1181] ss:$16 sm:%s1182]
  %vm1184 = vcmask 1047558
  %v1185 = vsel %vm1184, %v1183, %v1180
  %1186 = vrot.lane.b32.xlu0 %v1185, 36
  %v1187 = vpop.permute.xlu0 %1186
  %vm1188 = vcmask 326944
  %s1189 = scalar_lea.vmem %s1, 41
  %1190 = vst.msk [vmem:[%s1189] sm:$0x3f] %vm1188, %v1187
  %s1191 = scalar_lea.vmem %s1, 42
  %1192 = vst.msk [vmem:[%s1191] sm:$0xc0] %vm1188, %v1187
  %s1193 = scalar_lea.vmem %s0, 265
  %s1194 = smov 3
  %v1195 = vld [vmem:[%s1193] ss:$16 sm:%s1194]
  %s1196 = scalar_lea.vmem %s0, 265
  %s1197 = smov 12
  %v1198 = vld [vmem:[%s1196] ss:$16 sm:%s1197]
  %vm1199 = vcmask 1043458
  %v1200 = vsel %vm1199, %v1198, %v1195
  %s1201 = scalar_lea.vmem %s0, 265
  %s1202 = smov 48
  %v1203 = vld [vmem:[%s1201] ss:$16 sm:%s1202]
  %vm1204 = vcmask 1045508
  %v1205 = vsel %vm1204, %v1203, %v1200
  %s1206 = scalar_lea.vmem %s0, 265
  %s1207 = smov 192
  %v1208 = vld [vmem:[%s1206] ss:$16 sm:%s1207]
  %vm1209 = vcmask 1047558
  %v1210 = vsel %vm1209, %v1208, %v1205
  %1211 = vrot.lane.b32.xlu0 %v1210, 36
  %v1212 = vpop.permute.xlu0 %1211
  %vm1213 = vcmask 326944
  %s1214 = scalar_lea.vmem %s1, 18
  %1215 = vst.msk [vmem:[%s1214] sm:$0x1f] %vm1213, %v1212
  %s1216 = scalar_lea.vmem %s1, 19
  %1217 = vst.msk [vmem:[%s1216] sm:$0xe0] %vm1213, %v1212
  %s1218 = scalar_lea.vmem %s0, 713
  %s1219 = smov 3
  %v1220 = vld [vmem:[%s1218] ss:$16 sm:%s1219]
  %s1221 = scalar_lea.vmem %s0, 713
  %s1222 = smov 12
  %v1223 = vld [vmem:[%s1221] ss:$16 sm:%s1222]
  %vm1224 = vcmask 1043458
  %v1225 = vsel %vm1224, %v1223, %v1220
  %s1226 = scalar_lea.vmem %s0, 773
  %v1227 = vld [vmem:[%s1226] sm:$0x10]
  %vm1228 = vcmask 1044484
  %v1229 = vsel %vm1228, %v1227, %v1225
  %s1230 = scalar_lea.vmem %s0, 313
  %s1231 = smov 96
  %v1232 = vld [vmem:[%s1230] ss:$16 sm:%s1231]
  %vm1233 = vcmask 1046533
  %v1234 = vsel %vm1233, %v1232, %v1229
  %s1235 = scalar_lea.vmem %s0, 418
  %v1236 = vld [vmem:[%s1235] sm:$0x80]
  %vm1237 = vcmask 1047559
  %v1238 = vsel %vm1237, %v1236, %v1234
  %1239 = vrot.lane.b32.xlu0 %v1238, 36
  %v1240 = vpop.permute.xlu0 %1239
  %vm1241 = vcmask 326944
  %s1242 = scalar_lea.vmem %s1, 50
  %1243 = vst.msk [vmem:[%s1242] sm:$0x1f] %vm1241, %v1240
  %s1244 = scalar_lea.vmem %s1, 22
  %1245 = vst.msk [vmem:[%s1244] sm:$0xe0] %vm1241, %v1240
  %s1246 = scalar_lea.vmem %s0, 441
  %v1247 = vld [vmem:[%s1246] sm:$0x1]
  %1248 = vrot.lane.b32.xlu0 %v1247, 36
  %v1249 = vpop.permute.xlu0 %1248
  %vm1250 = vcmask 326944
  %s1251 = scalar_lea.vmem %s1, 30
  %1252 = vst.msk [vmem:[%s1251] sm:$0x1] %vm1250, %v1249
  %s1253 = scalar_lea.vmem %s0, 8
  %s1254 = smov 3
  %v1255 = vld [vmem:[%s1253] ss:$16 sm:%s1254]
  %s1256 = scalar_lea.vmem %s0, 8
  %s1257 = smov 12
  %v1258 = vld [vmem:[%s1256] ss:$16 sm:%s1257]
  %vm1259 = vcmask 1043458
  %v1260 = vsel %vm1259, %v1258, %v1255
  %s1261 = scalar_lea.vmem %s0, 8
  %s1262 = smov 48
  %v1263 = vld [vmem:[%s1261] ss:$16 sm:%s1262]
  %vm1264 = vcmask 1045508
  %v1265 = vsel %vm1264, %v1263, %v1260
  %s1266 = scalar_lea.vmem %s0, 8
  %s1267 = smov 192
  %v1268 = vld [vmem:[%s1266] ss:$16 sm:%s1267]
  %vm1269 = vcmask 1047558
  %v1270 = vsel %vm1269, %v1268, %v1265
  %1271 = vrot.lane.b32.xlu0 %v1270, 32
  %v1272 = vpop.permute.xlu0 %1271
  %vm1273 = vcmask 294144
  %1274 = vst.msk [vmem:[%s1] sm:$0x7f] %vm1273, %v1272
  %s1275 = scalar_lea.vmem %s1, 1
  %1276 = vst.msk [vmem:[%s1275] sm:$0x80] %vm1273, %v1272
  %s1277 = scalar_lea.vmem %s0, 456
  %s1278 = smov 3
  %v1279 = vld [vmem:[%s1277] ss:$16 sm:%s1278]
  %s1280 = scalar_lea.vmem %s0, 456
  %s1281 = smov 12
  %v1282 = vld [vmem:[%s1280] ss:$16 sm:%s1281]
  %vm1283 = vcmask 1043458
  %v1284 = vsel %vm1283, %v1282, %v1279
  %s1285 = scalar_lea.vmem %s0, 456
  %s1286 = smov 48
  %v1287 = vld [vmem:[%s1285] ss:$16 sm:%s1286]
  %vm1288 = vcmask 1045508
  %v1289 = vsel %vm1288, %v1287, %v1284
  %s1290 = scalar_lea.vmem %s0, 456
  %s1291 = smov 192
  %v1292 = vld [vmem:[%s1290] ss:$16 sm:%s1291]
  %vm1293 = vcmask 1047558
  %v1294 = vsel %vm1293, %v1292, %v1289
  %1295 = vrot.lane.b32.xlu0 %v1294, 32
  %v1296 = vpop.permute.xlu0 %1295
  %vm1297 = vcmask 294144
  %s1298 = scalar_lea.vmem %s1, 32
  %1299 = vst.msk [vmem:[%s1298] sm:$0x7f] %vm1297, %v1296
  %s1300 = scalar_lea.vmem %s1, 33
  %1301 = vst.msk [vmem:[%s1300] sm:$0x80] %vm1297, %v1296
  %s1302 = scalar_lea.vmem %s0, 136
  %s1303 = smov 3
  %v1304 = vld [vmem:[%s1302] ss:$16 sm:%s1303]
  %s1305 = scalar_lea.vmem %s0, 136
  %s1306 = smov 12
  %v1307 = vld [vmem:[%s1305] ss:$16 sm:%s1306]
  %vm1308 = vcmask 1043458
  %v1309 = vsel %vm1308, %v1307, %v1304
  %s1310 = scalar_lea.vmem %s0, 136
  %s1311 = smov 48
  %v1312 = vld [vmem:[%s1310] ss:$16 sm:%s1311]
  %vm1313 = vcmask 1045508
  %v1314 = vsel %vm1313, %v1312, %v1309
  %s1315 = scalar_lea.vmem %s0, 136
  %s1316 = smov 192
  %v1317 = vld [vmem:[%s1315] ss:$16 sm:%s1316]
  %vm1318 = vcmask 1047558
  %v1319 = vsel %vm1318, %v1317, %v1314
  %1320 = vrot.lane.b32.xlu0 %v1319, 32
  %v1321 = vpop.permute.xlu0 %1320
  %vm1322 = vcmask 294144
  %s1323 = scalar_lea.vmem %s1, 9
  %1324 = vst.msk [vmem:[%s1323] sm:$0x3f] %vm1322, %v1321
  %s1325 = scalar_lea.vmem %s1, 10
  %1326 = vst.msk [vmem:[%s1325] sm:$0xc0] %vm1322, %v1321
  %s1327 = scalar_lea.vmem %s0, 584
  %s1328 = smov 3
  %v1329 = vld [vmem:[%s1327] ss:$16 sm:%s1328]
  %s1330 = scalar_lea.vmem %s0, 584
  %s1331 = smov 12
  %v1332 = vld [vmem:[%s1330] ss:$16 sm:%s1331]
  %vm1333 = vcmask 1043458
  %v1334 = vsel %vm1333, %v1332, %v1329
  %s1335 = scalar_lea.vmem %s0, 584
  %s1336 = smov 48
  %v1337 = vld [vmem:[%s1335] ss:$16 sm:%s1336]
  %vm1338 = vcmask 1045508
  %v1339 = vsel %vm1338, %v1337, %v1334
  %s1340 = scalar_lea.vmem %s0, 584
  %s1341 = smov 192
  %v1342 = vld [vmem:[%s1340] ss:$16 sm:%s1341]
  %vm1343 = vcmask 1047558
  %v1344 = vsel %vm1343, %v1342, %v1339
  %1345 = vrot.lane.b32.xlu0 %v1344, 32
  %v1346 = vpop.permute.xlu0 %1345
  %vm1347 = vcmask 294144
  %s1348 = scalar_lea.vmem %s1, 41
  %1349 = vst.msk [vmem:[%s1348] sm:$0x3f] %vm1347, %v1346
  %s1350 = scalar_lea.vmem %s1, 42
  %1351 = vst.msk [vmem:[%s1350] sm:$0xc0] %vm1347, %v1346
  %s1352 = scalar_lea.vmem %s0, 264
  %s1353 = smov 3
  %v1354 = vld [vmem:[%s1352] ss:$16 sm:%s1353]
  %s1355 = scalar_lea.vmem %s0, 264
  %s1356 = smov 12
  %v1357 = vld [vmem:[%s1355] ss:$16 sm:%s1356]
  %vm1358 = vcmask 1043458
  %v1359 = vsel %vm1358, %v1357, %v1354
  %s1360 = scalar_lea.vmem %s0, 264
  %s1361 = smov 48
  %v1362 = vld [vmem:[%s1360] ss:$16 sm:%s1361]
  %vm1363 = vcmask 1045508
  %v1364 = vsel %vm1363, %v1362, %v1359
  %s1365 = scalar_lea.vmem %s0, 264
  %s1366 = smov 192
  %v1367 = vld [vmem:[%s1365] ss:$16 sm:%s1366]
  %vm1368 = vcmask 1047558
  %v1369 = vsel %vm1368, %v1367, %v1364
  %1370 = vrot.lane.b32.xlu0 %v1369, 32
  %v1371 = vpop.permute.xlu0 %1370
  %vm1372 = vcmask 294144
  %s1373 = scalar_lea.vmem %s1, 18
  %1374 = vst.msk [vmem:[%s1373] sm:$0x1f] %vm1372, %v1371
  %s1375 = scalar_lea.vmem %s1, 19
  %1376 = vst.msk [vmem:[%s1375] sm:$0xe0] %vm1372, %v1371
  %s1377 = scalar_lea.vmem %s0, 712
  %s1378 = smov 3
  %v1379 = vld [vmem:[%s1377] ss:$16 sm:%s1378]
  %s1380 = scalar_lea.vmem %s0, 712
  %s1381 = smov 12
  %v1382 = vld [vmem:[%s1380] ss:$16 sm:%s1381]
  %vm1383 = vcmask 1043458
  %v1384 = vsel %vm1383, %v1382, %v1379
  %s1385 = scalar_lea.vmem %s0, 772
  %v1386 = vld [vmem:[%s1385] sm:$0x10]
  %vm1387 = vcmask 1044484
  %v1388 = vsel %vm1387, %v1386, %v1384
  %s1389 = scalar_lea.vmem %s0, 312
  %s1390 = smov 96
  %v1391 = vld [vmem:[%s1389] ss:$16 sm:%s1390]
  %vm1392 = vcmask 1046533
  %v1393 = vsel %vm1392, %v1391, %v1388
  %s1394 = scalar_lea.vmem %s0, 417
  %v1395 = vld [vmem:[%s1394] sm:$0x80]
  %vm1396 = vcmask 1047559
  %v1397 = vsel %vm1396, %v1395, %v1393
  %1398 = vrot.lane.b32.xlu0 %v1397, 32
  %v1399 = vpop.permute.xlu0 %1398
  %vm1400 = vcmask 294144
  %s1401 = scalar_lea.vmem %s1, 50
  %1402 = vst.msk [vmem:[%s1401] sm:$0x1f] %vm1400, %v1399
  %s1403 = scalar_lea.vmem %s1, 22
  %1404 = vst.msk [vmem:[%s1403] sm:$0xe0] %vm1400, %v1399
  %s1405 = scalar_lea.vmem %s0, 440
  %v1406 = vld [vmem:[%s1405] sm:$0x1]
  %1407 = vrot.lane.b32.xlu0 %v1406, 32
  %v1408 = vpop.permute.xlu0 %1407
  %vm1409 = vcmask 294144
  %s1410 = scalar_lea.vmem %s1, 30
  %1411 = vst.msk [vmem:[%s1410] sm:$0x1] %vm1409, %v1408
  %s1412 = scalar_lea.vmem %s0, 7
  %s1413 = smov 3
  %v1414 = vld [vmem:[%s1412] ss:$16 sm:%s1413]
  %s1415 = scalar_lea.vmem %s0, 7
  %s1416 = smov 12
  %v1417 = vld [vmem:[%s1415] ss:$16 sm:%s1416]
  %vm1418 = vcmask 1043458
  %v1419 = vsel %vm1418, %v1417, %v1414
  %s1420 = scalar_lea.vmem %s0, 7
  %s1421 = smov 48
  %v1422 = vld [vmem:[%s1420] ss:$16 sm:%s1421]
  %vm1423 = vcmask 1045508
  %v1424 = vsel %vm1423, %v1422, %v1419
  %s1425 = scalar_lea.vmem %s0, 7
  %s1426 = smov 192
  %v1427 = vld [vmem:[%s1425] ss:$16 sm:%s1426]
  %vm1428 = vcmask 1047558
  %v1429 = vsel %vm1428, %v1427, %v1424
  %1430 = vrot.lane.b32.xlu0 %v1429, 28
  %v1431 = vpop.permute.xlu0 %1430
  %vm1432 = vcmask 261344
  %1433 = vst.msk [vmem:[%s1] sm:$0x7f] %vm1432, %v1431
  %s1434 = scalar_lea.vmem %s1, 1
  %1435 = vst.msk [vmem:[%s1434] sm:$0x80] %vm1432, %v1431
  %s1436 = scalar_lea.vmem %s0, 455
  %s1437 = smov 3
  %v1438 = vld [vmem:[%s1436] ss:$16 sm:%s1437]
  %s1439 = scalar_lea.vmem %s0, 455
  %s1440 = smov 12
  %v1441 = vld [vmem:[%s1439] ss:$16 sm:%s1440]
  %vm1442 = vcmask 1043458
  %v1443 = vsel %vm1442, %v1441, %v1438
  %s1444 = scalar_lea.vmem %s0, 455
  %s1445 = smov 48
  %v1446 = vld [vmem:[%s1444] ss:$16 sm:%s1445]
  %vm1447 = vcmask 1045508
  %v1448 = vsel %vm1447, %v1446, %v1443
  %s1449 = scalar_lea.vmem %s0, 455
  %s1450 = smov 192
  %v1451 = vld [vmem:[%s1449] ss:$16 sm:%s1450]
  %vm1452 = vcmask 1047558
  %v1453 = vsel %vm1452, %v1451, %v1448
  %1454 = vrot.lane.b32.xlu0 %v1453, 28
  %v1455 = vpop.permute.xlu0 %1454
  %vm1456 = vcmask 261344
  %s1457 = scalar_lea.vmem %s1, 32
  %1458 = vst.msk [vmem:[%s1457] sm:$0x7f] %vm1456, %v1455
  %s1459 = scalar_lea.vmem %s1, 33
  %1460 = vst.msk [vmem:[%s1459] sm:$0x80] %vm1456, %v1455
  %s1461 = scalar_lea.vmem %s0, 135
  %s1462 = smov 3
  %v1463 = vld [vmem:[%s1461] ss:$16 sm:%s1462]
  %s1464 = scalar_lea.vmem %s0, 135
  %s1465 = smov 12
  %v1466 = vld [vmem:[%s1464] ss:$16 sm:%s1465]
  %vm1467 = vcmask 1043458
  %v1468 = vsel %vm1467, %v1466, %v1463
  %s1469 = scalar_lea.vmem %s0, 135
  %s1470 = smov 48
  %v1471 = vld [vmem:[%s1469] ss:$16 sm:%s1470]
  %vm1472 = vcmask 1045508
  %v1473 = vsel %vm1472, %v1471, %v1468
  %s1474 = scalar_lea.vmem %s0, 135
  %s1475 = smov 192
  %v1476 = vld [vmem:[%s1474] ss:$16 sm:%s1475]
  %vm1477 = vcmask 1047558
  %v1478 = vsel %vm1477, %v1476, %v1473
  %1479 = vrot.lane.b32.xlu0 %v1478, 28
  %v1480 = vpop.permute.xlu0 %1479
  %vm1481 = vcmask 261344
  %s1482 = scalar_lea.vmem %s1, 9
  %1483 = vst.msk [vmem:[%s1482] sm:$0x3f] %vm1481, %v1480
  %s1484 = scalar_lea.vmem %s1, 10
  %1485 = vst.msk [vmem:[%s1484] sm:$0xc0] %vm1481, %v1480
  %s1486 = scalar_lea.vmem %s0, 583
  %s1487 = smov 3
  %v1488 = vld [vmem:[%s1486] ss:$16 sm:%s1487]
  %s1489 = scalar_lea.vmem %s0, 583
  %s1490 = smov 12
  %v1491 = vld [vmem:[%s1489] ss:$16 sm:%s1490]
  %vm1492 = vcmask 1043458
  %v1493 = vsel %vm1492, %v1491, %v1488
  %s1494 = scalar_lea.vmem %s0, 583
  %s1495 = smov 48
  %v1496 = vld [vmem:[%s1494] ss:$16 sm:%s1495]
  %vm1497 = vcmask 1045508
  %v1498 = vsel %vm1497, %v1496, %v1493
  %s1499 = scalar_lea.vmem %s0, 583
  %s1500 = smov 192
  %v1501 = vld [vmem:[%s1499] ss:$16 sm:%s1500]
  %vm1502 = vcmask 1047558
  %v1503 = vsel %vm1502, %v1501, %v1498
  %1504 = vrot.lane.b32.xlu0 %v1503, 28
  %v1505 = vpop.permute.xlu0 %1504
  %vm1506 = vcmask 261344
  %s1507 = scalar_lea.vmem %s1, 41
  %1508 = vst.msk [vmem:[%s1507] sm:$0x3f] %vm1506, %v1505
  %s1509 = scalar_lea.vmem %s1, 42
  %1510 = vst.msk [vmem:[%s1509] sm:$0xc0] %vm1506, %v1505
  %s1511 = scalar_lea.vmem %s0, 263
  %s1512 = smov 3
  %v1513 = vld [vmem:[%s1511] ss:$16 sm:%s1512]
  %s1514 = scalar_lea.vmem %s0, 263
  %s1515 = smov 12
  %v1516 = vld [vmem:[%s1514] ss:$16 sm:%s1515]
  %vm1517 = vcmask 1043458
  %v1518 = vsel %vm1517, %v1516, %v1513
  %s1519 = scalar_lea.vmem %s0, 263
  %s1520 = smov 48
  %v1521 = vld [vmem:[%s1519] ss:$16 sm:%s1520]
  %vm1522 = vcmask 1045508
  %v1523 = vsel %vm1522, %v1521, %v1518
  %s1524 = scalar_lea.vmem %s0, 263
  %s1525 = smov 192
  %v1526 = vld [vmem:[%s1524] ss:$16 sm:%s1525]
  %vm1527 = vcmask 1047558
  %v1528 = vsel %vm1527, %v1526, %v1523
  %1529 = vrot.lane.b32.xlu0 %v1528, 28
  %v1530 = vpop.permute.xlu0 %1529
  %vm1531 = vcmask 261344
  %s1532 = scalar_lea.vmem %s1, 18
  %1533 = vst.msk [vmem:[%s1532] sm:$0x1f] %vm1531, %v1530
  %s1534 = scalar_lea.vmem %s1, 19
  %1535 = vst.msk [vmem:[%s1534] sm:$0xe0] %vm1531, %v1530
  %s1536 = scalar_lea.vmem %s0, 711
  %s1537 = smov 3
  %v1538 = vld [vmem:[%s1536] ss:$16 sm:%s1537]
  %s1539 = scalar_lea.vmem %s0, 711
  %s1540 = smov 12
  %v1541 = vld [vmem:[%s1539] ss:$16 sm:%s1540]
  %vm1542 = vcmask 1043458
  %v1543 = vsel %vm1542, %v1541, %v1538
  %s1544 = scalar_lea.vmem %s0, 771
  %v1545 = vld [vmem:[%s1544] sm:$0x10]
  %vm1546 = vcmask 1044484
  %v1547 = vsel %vm1546, %v1545, %v1543
  %s1548 = scalar_lea.vmem %s0, 311
  %s1549 = smov 96
  %v1550 = vld [vmem:[%s1548] ss:$16 sm:%s1549]
  %vm1551 = vcmask 1046533
  %v1552 = vsel %vm1551, %v1550, %v1547
  %s1553 = scalar_lea.vmem %s0, 416
  %v1554 = vld [vmem:[%s1553] sm:$0x80]
  %vm1555 = vcmask 1047559
  %v1556 = vsel %vm1555, %v1554, %v1552
  %1557 = vrot.lane.b32.xlu0 %v1556, 28
  %v1558 = vpop.permute.xlu0 %1557
  %vm1559 = vcmask 261344
  %s1560 = scalar_lea.vmem %s1, 50
  %1561 = vst.msk [vmem:[%s1560] sm:$0x1f] %vm1559, %v1558
  %s1562 = scalar_lea.vmem %s1, 22
  %1563 = vst.msk [vmem:[%s1562] sm:$0xe0] %vm1559, %v1558
  %s1564 = scalar_lea.vmem %s0, 439
  %v1565 = vld [vmem:[%s1564] sm:$0x1]
  %1566 = vrot.lane.b32.xlu0 %v1565, 28
  %v1567 = vpop.permute.xlu0 %1566
  %vm1568 = vcmask 261344
  %s1569 = scalar_lea.vmem %s1, 30
  %1570 = vst.msk [vmem:[%s1569] sm:$0x1] %vm1568, %v1567
  %s1571 = scalar_lea.vmem %s0, 6
  %s1572 = smov 3
  %v1573 = vld [vmem:[%s1571] ss:$16 sm:%s1572]
  %s1574 = scalar_lea.vmem %s0, 6
  %s1575 = smov 12
  %v1576 = vld [vmem:[%s1574] ss:$16 sm:%s1575]
  %vm1577 = vcmask 1043458
  %v1578 = vsel %vm1577, %v1576, %v1573
  %s1579 = scalar_lea.vmem %s0, 6
  %s1580 = smov 48
  %v1581 = vld [vmem:[%s1579] ss:$16 sm:%s1580]
  %vm1582 = vcmask 1045508
  %v1583 = vsel %vm1582, %v1581, %v1578
  %s1584 = scalar_lea.vmem %s0, 6
  %s1585 = smov 192
  %v1586 = vld [vmem:[%s1584] ss:$16 sm:%s1585]
  %vm1587 = vcmask 1047558
  %v1588 = vsel %vm1587, %v1586, %v1583
  %1589 = vrot.lane.b32.xlu0 %v1588, 24
  %v1590 = vpop.permute.xlu0 %1589
  %vm1591 = vcmask 228544
  %1592 = vst.msk [vmem:[%s1] sm:$0x7f] %vm1591, %v1590
  %s1593 = scalar_lea.vmem %s1, 1
  %1594 = vst.msk [vmem:[%s1593] sm:$0x80] %vm1591, %v1590
  %s1595 = scalar_lea.vmem %s0, 454
  %s1596 = smov 3
  %v1597 = vld [vmem:[%s1595] ss:$16 sm:%s1596]
  %s1598 = scalar_lea.vmem %s0, 454
  %s1599 = smov 12
  %v1600 = vld [vmem:[%s1598] ss:$16 sm:%s1599]
  %vm1601 = vcmask 1043458
  %v1602 = vsel %vm1601, %v1600, %v1597
  %s1603 = scalar_lea.vmem %s0, 454
  %s1604 = smov 48
  %v1605 = vld [vmem:[%s1603] ss:$16 sm:%s1604]
  %vm1606 = vcmask 1045508
  %v1607 = vsel %vm1606, %v1605, %v1602
  %s1608 = scalar_lea.vmem %s0, 454
  %s1609 = smov 192
  %v1610 = vld [vmem:[%s1608] ss:$16 sm:%s1609]
  %vm1611 = vcmask 1047558
  %v1612 = vsel %vm1611, %v1610, %v1607
  %1613 = vrot.lane.b32.xlu0 %v1612, 24
  %v1614 = vpop.permute.xlu0 %1613
  %vm1615 = vcmask 228544
  %s1616 = scalar_lea.vmem %s1, 32
  %1617 = vst.msk [vmem:[%s1616] sm:$0x7f] %vm1615, %v1614
  %s1618 = scalar_lea.vmem %s1, 33
  %1619 = vst.msk [vmem:[%s1618] sm:$0x80] %vm1615, %v1614
  %s1620 = scalar_lea.vmem %s0, 134
  %s1621 = smov 3
  %v1622 = vld [vmem:[%s1620] ss:$16 sm:%s1621]
  %s1623 = scalar_lea.vmem %s0, 134
  %s1624 = smov 12
  %v1625 = vld [vmem:[%s1623] ss:$16 sm:%s1624]
  %vm1626 = vcmask 1043458
  %v1627 = vsel %vm1626, %v1625, %v1622
  %s1628 = scalar_lea.vmem %s0, 134
  %s1629 = smov 48
  %v1630 = vld [vmem:[%s1628] ss:$16 sm:%s1629]
  %vm1631 = vcmask 1045508
  %v1632 = vsel %vm1631, %v1630, %v1627
  %s1633 = scalar_lea.vmem %s0, 134
  %s1634 = smov 192
  %v1635 = vld [vmem:[%s1633] ss:$16 sm:%s1634]
  %vm1636 = vcmask 1047558
  %v1637 = vsel %vm1636, %v1635, %v1632
  %1638 = vrot.lane.b32.xlu0 %v1637, 24
  %v1639 = vpop.permute.xlu0 %1638
  %vm1640 = vcmask 228544
  %s1641 = scalar_lea.vmem %s1, 9
  %1642 = vst.msk [vmem:[%s1641] sm:$0x3f] %vm1640, %v1639
  %s1643 = scalar_lea.vmem %s1, 10
  %1644 = vst.msk [vmem:[%s1643] sm:$0xc0] %vm1640, %v1639
  %s1645 = scalar_lea.vmem %s0, 582
  %s1646 = smov 3
  %v1647 = vld [vmem:[%s1645] ss:$16 sm:%s1646]
  %s1648 = scalar_lea.vmem %s0, 582
  %s1649 = smov 12
  %v1650 = vld [vmem:[%s1648] ss:$16 sm:%s1649]
  %vm1651 = vcmask 1043458
  %v1652 = vsel %vm1651, %v1650, %v1647
  %s1653 = scalar_lea.vmem %s0, 582
  %s1654 = smov 48
  %v1655 = vld [vmem:[%s1653] ss:$16 sm:%s1654]
  %vm1656 = vcmask 1045508
  %v1657 = vsel %vm1656, %v1655, %v1652
  %s1658 = scalar_lea.vmem %s0, 582
  %s1659 = smov 192
  %v1660 = vld [vmem:[%s1658] ss:$16 sm:%s1659]
  %vm1661 = vcmask 1047558
  %v1662 = vsel %vm1661, %v1660, %v1657
  %1663 = vrot.lane.b32.xlu0 %v1662, 24
  %v1664 = vpop.permute.xlu0 %1663
  %vm1665 = vcmask 228544
  %s1666 = scalar_lea.vmem %s1, 41
  %1667 = vst.msk [vmem:[%s1666] sm:$0x3f] %vm1665, %v1664
  %s1668 = scalar_lea.vmem %s1, 42
  %1669 = vst.msk [vmem:[%s1668] sm:$0xc0] %vm1665, %v1664
  %s1670 = scalar_lea.vmem %s0, 262
  %s1671 = smov 3
  %v1672 = vld [vmem:[%s1670] ss:$16 sm:%s1671]
  %s1673 = scalar_lea.vmem %s0, 262
  %s1674 = smov 12
  %v1675 = vld [vmem:[%s1673] ss:$16 sm:%s1674]
  %vm1676 = vcmask 1043458
  %v1677 = vsel %vm1676, %v1675, %v1672
  %s1678 = scalar_lea.vmem %s0, 262
  %s1679 = smov 48
  %v1680 = vld [vmem:[%s1678] ss:$16 sm:%s1679]
  %vm1681 = vcmask 1045508
  %v1682 = vsel %vm1681, %v1680, %v1677
  %s1683 = scalar_lea.vmem %s0, 262
  %s1684 = smov 192
  %v1685 = vld [vmem:[%s1683] ss:$16 sm:%s1684]
  %vm1686 = vcmask 1047558
  %v1687 = vsel %vm1686, %v1685, %v1682
  %1688 = vrot.lane.b32.xlu0 %v1687, 24
  %v1689 = vpop.permute.xlu0 %1688
  %vm1690 = vcmask 228544
  %s1691 = scalar_lea.vmem %s1, 18
  %1692 = vst.msk [vmem:[%s1691] sm:$0x1f] %vm1690, %v1689
  %s1693 = scalar_lea.vmem %s1, 19
  %1694 = vst.msk [vmem:[%s1693] sm:$0xe0] %vm1690, %v1689
  %s1695 = scalar_lea.vmem %s0, 710
  %s1696 = smov 3
  %v1697 = vld [vmem:[%s1695] ss:$16 sm:%s1696]
  %s1698 = scalar_lea.vmem %s0, 710
  %s1699 = smov 12
  %v1700 = vld [vmem:[%s1698] ss:$16 sm:%s1699]
  %vm1701 = vcmask 1043458
  %v1702 = vsel %vm1701, %v1700, %v1697
  %s1703 = scalar_lea.vmem %s0, 770
  %v1704 = vld [vmem:[%s1703] sm:$0x10]
  %vm1705 = vcmask 1044484
  %v1706 = vsel %vm1705, %v1704, %v1702
  %s1707 = scalar_lea.vmem %s0, 310
  %s1708 = smov 96
  %v1709 = vld [vmem:[%s1707] ss:$16 sm:%s1708]
  %vm1710 = vcmask 1046533
  %v1711 = vsel %vm1710, %v1709, %v1706
  %s1712 = scalar_lea.vmem %s0, 415
  %v1713 = vld [vmem:[%s1712] sm:$0x80]
  %vm1714 = vcmask 1047559
  %v1715 = vsel %vm1714, %v1713, %v1711
  %1716 = vrot.lane.b32.xlu0 %v1715, 24
  %v1717 = vpop.permute.xlu0 %1716
  %vm1718 = vcmask 228544
  %s1719 = scalar_lea.vmem %s1, 50
  %1720 = vst.msk [vmem:[%s1719] sm:$0x1f] %vm1718, %v1717
  %s1721 = scalar_lea.vmem %s1, 22
  %1722 = vst.msk [vmem:[%s1721] sm:$0xe0] %vm1718, %v1717
  %s1723 = scalar_lea.vmem %s0, 438
  %v1724 = vld [vmem:[%s1723] sm:$0x1]
  %1725 = vrot.lane.b32.xlu0 %v1724, 24
  %v1726 = vpop.permute.xlu0 %1725
  %vm1727 = vcmask 228544
  %s1728 = scalar_lea.vmem %s1, 30
  %1729 = vst.msk [vmem:[%s1728] sm:$0x1] %vm1727, %v1726
  %s1730 = scalar_lea.vmem %s0, 5
  %s1731 = smov 3
  %v1732 = vld [vmem:[%s1730] ss:$16 sm:%s1731]
  %s1733 = scalar_lea.vmem %s0, 5
  %s1734 = smov 12
  %v1735 = vld [vmem:[%s1733] ss:$16 sm:%s1734]
  %vm1736 = vcmask 1043458
  %v1737 = vsel %vm1736, %v1735, %v1732
  %s1738 = scalar_lea.vmem %s0, 5
  %s1739 = smov 48
  %v1740 = vld [vmem:[%s1738] ss:$16 sm:%s1739]
  %vm1741 = vcmask 1045508
  %v1742 = vsel %vm1741, %v1740, %v1737
  %s1743 = scalar_lea.vmem %s0, 5
  %s1744 = smov 192
  %v1745 = vld [vmem:[%s1743] ss:$16 sm:%s1744]
  %vm1746 = vcmask 1047558
  %v1747 = vsel %vm1746, %v1745, %v1742
  %1748 = vrot.lane.b32.xlu0 %v1747, 20
  %v1749 = vpop.permute.xlu0 %1748
  %vm1750 = vcmask 195744
  %1751 = vst.msk [vmem:[%s1] sm:$0x7f] %vm1750, %v1749
  %s1752 = scalar_lea.vmem %s1, 1
  %1753 = vst.msk [vmem:[%s1752] sm:$0x80] %vm1750, %v1749
  %s1754 = scalar_lea.vmem %s0, 453
  %s1755 = smov 3
  %v1756 = vld [vmem:[%s1754] ss:$16 sm:%s1755]
  %s1757 = scalar_lea.vmem %s0, 453
  %s1758 = smov 12
  %v1759 = vld [vmem:[%s1757] ss:$16 sm:%s1758]
  %vm1760 = vcmask 1043458
  %v1761 = vsel %vm1760, %v1759, %v1756
  %s1762 = scalar_lea.vmem %s0, 453
  %s1763 = smov 48
  %v1764 = vld [vmem:[%s1762] ss:$16 sm:%s1763]
  %vm1765 = vcmask 1045508
  %v1766 = vsel %vm1765, %v1764, %v1761
  %s1767 = scalar_lea.vmem %s0, 453
  %s1768 = smov 192
  %v1769 = vld [vmem:[%s1767] ss:$16 sm:%s1768]
  %vm1770 = vcmask 1047558
  %v1771 = vsel %vm1770, %v1769, %v1766
  %1772 = vrot.lane.b32.xlu0 %v1771, 20
  %v1773 = vpop.permute.xlu0 %1772
  %vm1774 = vcmask 195744
  %s1775 = scalar_lea.vmem %s1, 32
  %1776 = vst.msk [vmem:[%s1775] sm:$0x7f] %vm1774, %v1773
  %s1777 = scalar_lea.vmem %s1, 33
  %1778 = vst.msk [vmem:[%s1777] sm:$0x80] %vm1774, %v1773
  %s1779 = scalar_lea.vmem %s0, 133
  %s1780 = smov 3
  %v1781 = vld [vmem:[%s1779] ss:$16 sm:%s1780]
  %s1782 = scalar_lea.vmem %s0, 133
  %s1783 = smov 12
  %v1784 = vld [vmem:[%s1782] ss:$16 sm:%s1783]
  %vm1785 = vcmask 1043458
  %v1786 = vsel %vm1785, %v1784, %v1781
  %s1787 = scalar_lea.vmem %s0, 133
  %s1788 = smov 48
  %v1789 = vld [vmem:[%s1787] ss:$16 sm:%s1788]
  %vm1790 = vcmask 1045508
  %v1791 = vsel %vm1790, %v1789, %v1786
  %s1792 = scalar_lea.vmem %s0, 133
  %s1793 = smov 192
  %v1794 = vld [vmem:[%s1792] ss:$16 sm:%s1793]
  %vm1795 = vcmask 1047558
  %v1796 = vsel %vm1795, %v1794, %v1791
  %1797 = vrot.lane.b32.xlu0 %v1796, 20
  %v1798 = vpop.permute.xlu0 %1797
  %vm1799 = vcmask 195744
  %s1800 = scalar_lea.vmem %s1, 9
  %1801 = vst.msk [vmem:[%s1800] sm:$0x3f] %vm1799, %v1798
  %s1802 = scalar_lea.vmem %s1, 10
  %1803 = vst.msk [vmem:[%s1802] sm:$0xc0] %vm1799, %v1798
  %s1804 = scalar_lea.vmem %s0, 581
  %s1805 = smov 3
  %v1806 = vld [vmem:[%s1804] ss:$16 sm:%s1805]
  %s1807 = scalar_lea.vmem %s0, 581
  %s1808 = smov 12
  %v1809 = vld [vmem:[%s1807] ss:$16 sm:%s1808]
  %vm1810 = vcmask 1043458
  %v1811 = vsel %vm1810, %v1809, %v1806
  %s1812 = scalar_lea.vmem %s0, 581
  %s1813 = smov 48
  %v1814 = vld [vmem:[%s1812] ss:$16 sm:%s1813]
  %vm1815 = vcmask 1045508
  %v1816 = vsel %vm1815, %v1814, %v1811
  %s1817 = scalar_lea.vmem %s0, 581
  %s1818 = smov 192
  %v1819 = vld [vmem:[%s1817] ss:$16 sm:%s1818]
  %vm1820 = vcmask 1047558
  %v1821 = vsel %vm1820, %v1819, %v1816
  %1822 = vrot.lane.b32.xlu0 %v1821, 20
  %v1823 = vpop.permute.xlu0 %1822
  %vm1824 = vcmask 195744
  %s1825 = scalar_lea.vmem %s1, 41
  %1826 = vst.msk [vmem:[%s1825] sm:$0x3f] %vm1824, %v1823
  %s1827 = scalar_lea.vmem %s1, 42
  %1828 = vst.msk [vmem:[%s1827] sm:$0xc0] %vm1824, %v1823
  %s1829 = scalar_lea.vmem %s0, 261
  %s1830 = smov 3
  %v1831 = vld [vmem:[%s1829] ss:$16 sm:%s1830]
  %s1832 = scalar_lea.vmem %s0, 261
  %s1833 = smov 12
  %v1834 = vld [vmem:[%s1832] ss:$16 sm:%s1833]
  %vm1835 = vcmask 1043458
  %v1836 = vsel %vm1835, %v1834, %v1831
  %s1837 = scalar_lea.vmem %s0, 261
  %s1838 = smov 48
  %v1839 = vld [vmem:[%s1837] ss:$16 sm:%s1838]
  %vm1840 = vcmask 1045508
  %v1841 = vsel %vm1840, %v1839, %v1836
  %s1842 = scalar_lea.vmem %s0, 261
  %s1843 = smov 192
  %v1844 = vld [vmem:[%s1842] ss:$16 sm:%s1843]
  %vm1845 = vcmask 1047558
  %v1846 = vsel %vm1845, %v1844, %v1841
  %1847 = vrot.lane.b32.xlu0 %v1846, 20
  %v1848 = vpop.permute.xlu0 %1847
  %vm1849 = vcmask 195744
  %s1850 = scalar_lea.vmem %s1, 18
  %1851 = vst.msk [vmem:[%s1850] sm:$0x1f] %vm1849, %v1848
  %s1852 = scalar_lea.vmem %s1, 19
  %1853 = vst.msk [vmem:[%s1852] sm:$0xe0] %vm1849, %v1848
  %s1854 = scalar_lea.vmem %s0, 709
  %s1855 = smov 3
  %v1856 = vld [vmem:[%s1854] ss:$16 sm:%s1855]
  %s1857 = scalar_lea.vmem %s0, 709
  %s1858 = smov 12
  %v1859 = vld [vmem:[%s1857] ss:$16 sm:%s1858]
  %vm1860 = vcmask 1043458
  %v1861 = vsel %vm1860, %v1859, %v1856
  %s1862 = scalar_lea.vmem %s0, 769
  %v1863 = vld [vmem:[%s1862] sm:$0x10]
  %vm1864 = vcmask 1044484
  %v1865 = vsel %vm1864, %v1863, %v1861
  %s1866 = scalar_lea.vmem %s0, 309
  %s1867 = smov 96
  %v1868 = vld [vmem:[%s1866] ss:$16 sm:%s1867]
  %vm1869 = vcmask 1046533
  %v1870 = vsel %vm1869, %v1868, %v1865
  %s1871 = scalar_lea.vmem %s0, 414
  %v1872 = vld [vmem:[%s1871] sm:$0x80]
  %vm1873 = vcmask 1047559
  %v1874 = vsel %vm1873, %v1872, %v1870
  %1875 = vrot.lane.b32.xlu0 %v1874, 20
  %v1876 = vpop.permute.xlu0 %1875
  %vm1877 = vcmask 195744
  %s1878 = scalar_lea.vmem %s1, 50
  %1879 = vst.msk [vmem:[%s1878] sm:$0x1f] %vm1877, %v1876
  %s1880 = scalar_lea.vmem %s1, 22
  %1881 = vst.msk [vmem:[%s1880] sm:$0xe0] %vm1877, %v1876
  %s1882 = scalar_lea.vmem %s0, 437
  %v1883 = vld [vmem:[%s1882] sm:$0x1]
  %1884 = vrot.lane.b32.xlu0 %v1883, 20
  %v1885 = vpop.permute.xlu0 %1884
  %vm1886 = vcmask 195744
  %s1887 = scalar_lea.vmem %s1, 30
  %1888 = vst.msk [vmem:[%s1887] sm:$0x1] %vm1886, %v1885
  %s1889 = scalar_lea.vmem %s0, 4
  %s1890 = smov 3
  %v1891 = vld [vmem:[%s1889] ss:$16 sm:%s1890]
  %s1892 = scalar_lea.vmem %s0, 4
  %s1893 = smov 12
  %v1894 = vld [vmem:[%s1892] ss:$16 sm:%s1893]
  %vm1895 = vcmask 1043458
  %v1896 = vsel %vm1895, %v1894, %v1891
  %s1897 = scalar_lea.vmem %s0, 4
  %s1898 = smov 48
  %v1899 = vld [vmem:[%s1897] ss:$16 sm:%s1898]
  %vm1900 = vcmask 1045508
  %v1901 = vsel %vm1900, %v1899, %v1896
  %s1902 = scalar_lea.vmem %s0, 4
  %s1903 = smov 192
  %v1904 = vld [vmem:[%s1902] ss:$16 sm:%s1903]
  %vm1905 = vcmask 1047558
  %v1906 = vsel %vm1905, %v1904, %v1901
  %1907 = vrot.lane.b32.xlu0 %v1906, 16
  %v1908 = vpop.permute.xlu0 %1907
  %vm1909 = vcmask 162944
  %1910 = vst.msk [vmem:[%s1] sm:$0x7f] %vm1909, %v1908
  %s1911 = scalar_lea.vmem %s1, 1
  %1912 = vst.msk [vmem:[%s1911] sm:$0x80] %vm1909, %v1908
  %s1913 = scalar_lea.vmem %s0, 452
  %s1914 = smov 3
  %v1915 = vld [vmem:[%s1913] ss:$16 sm:%s1914]
  %s1916 = scalar_lea.vmem %s0, 452
  %s1917 = smov 12
  %v1918 = vld [vmem:[%s1916] ss:$16 sm:%s1917]
  %vm1919 = vcmask 1043458
  %v1920 = vsel %vm1919, %v1918, %v1915
  %s1921 = scalar_lea.vmem %s0, 452
  %s1922 = smov 48
  %v1923 = vld [vmem:[%s1921] ss:$16 sm:%s1922]
  %vm1924 = vcmask 1045508
  %v1925 = vsel %vm1924, %v1923, %v1920
  %s1926 = scalar_lea.vmem %s0, 452
  %s1927 = smov 192
  %v1928 = vld [vmem:[%s1926] ss:$16 sm:%s1927]
  %vm1929 = vcmask 1047558
  %v1930 = vsel %vm1929, %v1928, %v1925
  %1931 = vrot.lane.b32.xlu0 %v1930, 16
  %v1932 = vpop.permute.xlu0 %1931
  %vm1933 = vcmask 162944
  %s1934 = scalar_lea.vmem %s1, 32
  %1935 = vst.msk [vmem:[%s1934] sm:$0x7f] %vm1933, %v1932
  %s1936 = scalar_lea.vmem %s1, 33
  %1937 = vst.msk [vmem:[%s1936] sm:$0x80] %vm1933, %v1932
  %s1938 = scalar_lea.vmem %s0, 132
  %s1939 = smov 3
  %v1940 = vld [vmem:[%s1938] ss:$16 sm:%s1939]
  %s1941 = scalar_lea.vmem %s0, 132
  %s1942 = smov 12
  %v1943 = vld [vmem:[%s1941] ss:$16 sm:%s1942]
  %vm1944 = vcmask 1043458
  %v1945 = vsel %vm1944, %v1943, %v1940
  %s1946 = scalar_lea.vmem %s0, 132
  %s1947 = smov 48
  %v1948 = vld [vmem:[%s1946] ss:$16 sm:%s1947]
  %vm1949 = vcmask 1045508
  %v1950 = vsel %vm1949, %v1948, %v1945
  %s1951 = scalar_lea.vmem %s0, 132
  %s1952 = smov 192
  %v1953 = vld [vmem:[%s1951] ss:$16 sm:%s1952]
  %vm1954 = vcmask 1047558
  %v1955 = vsel %vm1954, %v1953, %v1950
  %1956 = vrot.lane.b32.xlu0 %v1955, 16
  %v1957 = vpop.permute.xlu0 %1956
  %vm1958 = vcmask 162944
  %s1959 = scalar_lea.vmem %s1, 9
  %1960 = vst.msk [vmem:[%s1959] sm:$0x3f] %vm1958, %v1957
  %s1961 = scalar_lea.vmem %s1, 10
  %1962 = vst.msk [vmem:[%s1961] sm:$0xc0] %vm1958, %v1957
  %s1963 = scalar_lea.vmem %s0, 580
  %s1964 = smov 3
  %v1965 = vld [vmem:[%s1963] ss:$16 sm:%s1964]
  %s1966 = scalar_lea.vmem %s0, 580
  %s1967 = smov 12
  %v1968 = vld [vmem:[%s1966] ss:$16 sm:%s1967]
  %vm1969 = vcmask 1043458
  %v1970 = vsel %vm1969, %v1968, %v1965
  %s1971 = scalar_lea.vmem %s0, 580
  %s1972 = smov 48
  %v1973 = vld [vmem:[%s1971] ss:$16 sm:%s1972]
  %vm1974 = vcmask 1045508
  %v1975 = vsel %vm1974, %v1973, %v1970
  %s1976 = scalar_lea.vmem %s0, 580
  %s1977 = smov 192
  %v1978 = vld [vmem:[%s1976] ss:$16 sm:%s1977]
  %vm1979 = vcmask 1047558
  %v1980 = vsel %vm1979, %v1978, %v1975
  %1981 = vrot.lane.b32.xlu0 %v1980, 16
  %v1982 = vpop.permute.xlu0 %1981
  %vm1983 = vcmask 162944
  %s1984 = scalar_lea.vmem %s1, 41
  %1985 = vst.msk [vmem:[%s1984] sm:$0x3f] %vm1983, %v1982
  %s1986 = scalar_lea.vmem %s1, 42
  %1987 = vst.msk [vmem:[%s1986] sm:$0xc0] %vm1983, %v1982
  %s1988 = scalar_lea.vmem %s0, 260
  %s1989 = smov 3
  %v1990 = vld [vmem:[%s1988] ss:$16 sm:%s1989]
  %s1991 = scalar_lea.vmem %s0, 260
  %s1992 = smov 12
  %v1993 = vld [vmem:[%s1991] ss:$16 sm:%s1992]
  %vm1994 = vcmask 1043458
  %v1995 = vsel %vm1994, %v1993, %v1990
  %s1996 = scalar_lea.vmem %s0, 260
  %s1997 = smov 48
  %v1998 = vld [vmem:[%s1996] ss:$16 sm:%s1997]
  %vm1999 = vcmask 1045508
  %v2000 = vsel %vm1999, %v1998, %v1995
  %s2001 = scalar_lea.vmem %s0, 260
  %s2002 = smov 192
  %v2003 = vld [vmem:[%s2001] ss:$16 sm:%s2002]
  %vm2004 = vcmask 1047558
  %v2005 = vsel %vm2004, %v2003, %v2000
  %2006 = vrot.lane.b32.xlu0 %v2005, 16
  %v2007 = vpop.permute.xlu0 %2006
  %vm2008 = vcmask 162944
  %s2009 = scalar_lea.vmem %s1, 18
  %2010 = vst.msk [vmem:[%s2009] sm:$0x1f] %vm2008, %v2007
  %s2011 = scalar_lea.vmem %s1, 19
  %2012 = vst.msk [vmem:[%s2011] sm:$0xe0] %vm2008, %v2007
  %s2013 = scalar_lea.vmem %s0, 708
  %s2014 = smov 3
  %v2015 = vld [vmem:[%s2013] ss:$16 sm:%s2014]
  %s2016 = scalar_lea.vmem %s0, 708
  %s2017 = smov 12
  %v2018 = vld [vmem:[%s2016] ss:$16 sm:%s2017]
  %vm2019 = vcmask 1043458
  %v2020 = vsel %vm2019, %v2018, %v2015
  %s2021 = scalar_lea.vmem %s0, 768
  %v2022 = vld [vmem:[%s2021] sm:$0x10]
  %vm2023 = vcmask 1044484
  %v2024 = vsel %vm2023, %v2022, %v2020
  %s2025 = scalar_lea.vmem %s0, 308
  %s2026 = smov 96
  %v2027 = vld [vmem:[%s2025] ss:$16 sm:%s2026]
  %vm2028 = vcmask 1046533
  %v2029 = vsel %vm2028, %v2027, %v2024
  %s2030 = scalar_lea.vmem %s0, 413
  %v2031 = vld [vmem:[%s2030] sm:$0x80]
  %vm2032 = vcmask 1047559
  %v2033 = vsel %vm2032, %v2031, %v2029
  %2034 = vrot.lane.b32.xlu0 %v2033, 16
  %v2035 = vpop.permute.xlu0 %2034
  %vm2036 = vcmask 162944
  %s2037 = scalar_lea.vmem %s1, 50
  %2038 = vst.msk [vmem:[%s2037] sm:$0x1f] %vm2036, %v2035
  %s2039 = scalar_lea.vmem %s1, 22
  %2040 = vst.msk [vmem:[%s2039] sm:$0xe0] %vm2036, %v2035
  %s2041 = scalar_lea.vmem %s0, 436
  %v2042 = vld [vmem:[%s2041] sm:$0x1]
  %2043 = vrot.lane.b32.xlu0 %v2042, 16
  %v2044 = vpop.permute.xlu0 %2043
  %vm2045 = vcmask 162944
  %s2046 = scalar_lea.vmem %s1, 30
  %2047 = vst.msk [vmem:[%s2046] sm:$0x1] %vm2045, %v2044
  %s2048 = scalar_lea.vmem %s0, 3
  %s2049 = smov 3
  %v2050 = vld [vmem:[%s2048] ss:$16 sm:%s2049]
  %s2051 = scalar_lea.vmem %s0, 3
  %s2052 = smov 12
  %v2053 = vld [vmem:[%s2051] ss:$16 sm:%s2052]
  %vm2054 = vcmask 1043458
  %v2055 = vsel %vm2054, %v2053, %v2050
  %s2056 = scalar_lea.vmem %s0, 3
  %s2057 = smov 48
  %v2058 = vld [vmem:[%s2056] ss:$16 sm:%s2057]
  %vm2059 = vcmask 1045508
  %v2060 = vsel %vm2059, %v2058, %v2055
  %s2061 = scalar_lea.vmem %s0, 3
  %s2062 = smov 192
  %v2063 = vld [vmem:[%s2061] ss:$16 sm:%s2062]
  %vm2064 = vcmask 1047558
  %v2065 = vsel %vm2064, %v2063, %v2060
  %2066 = vrot.lane.b32.xlu0 %v2065, 12
  %v2067 = vpop.permute.xlu0 %2066
  %vm2068 = vcmask 130144
  %2069 = vst.msk [vmem:[%s1] sm:$0x7f] %vm2068, %v2067
  %s2070 = scalar_lea.vmem %s1, 1
  %2071 = vst.msk [vmem:[%s2070] sm:$0x80] %vm2068, %v2067
  %s2072 = scalar_lea.vmem %s0, 451
  %s2073 = smov 3
  %v2074 = vld [vmem:[%s2072] ss:$16 sm:%s2073]
  %s2075 = scalar_lea.vmem %s0, 451
  %s2076 = smov 12
  %v2077 = vld [vmem:[%s2075] ss:$16 sm:%s2076]
  %vm2078 = vcmask 1043458
  %v2079 = vsel %vm2078, %v2077, %v2074
  %s2080 = scalar_lea.vmem %s0, 451
  %s2081 = smov 48
  %v2082 = vld [vmem:[%s2080] ss:$16 sm:%s2081]
  %vm2083 = vcmask 1045508
  %v2084 = vsel %vm2083, %v2082, %v2079
  %s2085 = scalar_lea.vmem %s0, 451
  %s2086 = smov 192
  %v2087 = vld [vmem:[%s2085] ss:$16 sm:%s2086]
  %vm2088 = vcmask 1047558
  %v2089 = vsel %vm2088, %v2087, %v2084
  %2090 = vrot.lane.b32.xlu0 %v2089, 12
  %v2091 = vpop.permute.xlu0 %2090
  %vm2092 = vcmask 130144
  %s2093 = scalar_lea.vmem %s1, 32
  %2094 = vst.msk [vmem:[%s2093] sm:$0x7f] %vm2092, %v2091
  %s2095 = scalar_lea.vmem %s1, 33
  %2096 = vst.msk [vmem:[%s2095] sm:$0x80] %vm2092, %v2091
  %s2097 = scalar_lea.vmem %s0, 131
  %s2098 = smov 3
  %v2099 = vld [vmem:[%s2097] ss:$16 sm:%s2098]
  %s2100 = scalar_lea.vmem %s0, 131
  %s2101 = smov 12
  %v2102 = vld [vmem:[%s2100] ss:$16 sm:%s2101]
  %vm2103 = vcmask 1043458
  %v2104 = vsel %vm2103, %v2102, %v2099
  %s2105 = scalar_lea.vmem %s0, 131
  %s2106 = smov 48
  %v2107 = vld [vmem:[%s2105] ss:$16 sm:%s2106]
  %vm2108 = vcmask 1045508
  %v2109 = vsel %vm2108, %v2107, %v2104
  %s2110 = scalar_lea.vmem %s0, 131
  %s2111 = smov 192
  %v2112 = vld [vmem:[%s2110] ss:$16 sm:%s2111]
  %vm2113 = vcmask 1047558
  %v2114 = vsel %vm2113, %v2112, %v2109
  %2115 = vrot.lane.b32.xlu0 %v2114, 12
  %v2116 = vpop.permute.xlu0 %2115
  %vm2117 = vcmask 130144
  %s2118 = scalar_lea.vmem %s1, 9
  %2119 = vst.msk [vmem:[%s2118] sm:$0x3f] %vm2117, %v2116
  %s2120 = scalar_lea.vmem %s1, 10
  %2121 = vst.msk [vmem:[%s2120] sm:$0xc0] %vm2117, %v2116
  %s2122 = scalar_lea.vmem %s0, 579
  %s2123 = smov 3
  %v2124 = vld [vmem:[%s2122] ss:$16 sm:%s2123]
  %s2125 = scalar_lea.vmem %s0, 579
  %s2126 = smov 12
  %v2127 = vld [vmem:[%s2125] ss:$16 sm:%s2126]
  %vm2128 = vcmask 1043458
  %v2129 = vsel %vm2128, %v2127, %v2124
  %s2130 = scalar_lea.vmem %s0, 579
  %s2131 = smov 48
  %v2132 = vld [vmem:[%s2130] ss:$16 sm:%s2131]
  %vm2133 = vcmask 1045508
  %v2134 = vsel %vm2133, %v2132, %v2129
  %s2135 = scalar_lea.vmem %s0, 579
  %s2136 = smov 192
  %v2137 = vld [vmem:[%s2135] ss:$16 sm:%s2136]
  %vm2138 = vcmask 1047558
  %v2139 = vsel %vm2138, %v2137, %v2134
  %2140 = vrot.lane.b32.xlu0 %v2139, 12
  %v2141 = vpop.permute.xlu0 %2140
  %vm2142 = vcmask 130144
  %s2143 = scalar_lea.vmem %s1, 41
  %2144 = vst.msk [vmem:[%s2143] sm:$0x3f] %vm2142, %v2141
  %s2145 = scalar_lea.vmem %s1, 42
  %2146 = vst.msk [vmem:[%s2145] sm:$0xc0] %vm2142, %v2141
  %s2147 = scalar_lea.vmem %s0, 259
  %s2148 = smov 3
  %v2149 = vld [vmem:[%s2147] ss:$16 sm:%s2148]
  %s2150 = scalar_lea.vmem %s0, 259
  %s2151 = smov 12
  %v2152 = vld [vmem:[%s2150] ss:$16 sm:%s2151]
  %vm2153 = vcmask 1043458
  %v2154 = vsel %vm2153, %v2152, %v2149
  %s2155 = scalar_lea.vmem %s0, 259
  %s2156 = smov 48
  %v2157 = vld [vmem:[%s2155] ss:$16 sm:%s2156]
  %vm2158 = vcmask 1045508
  %v2159 = vsel %vm2158, %v2157, %v2154
  %s2160 = scalar_lea.vmem %s0, 259
  %s2161 = smov 192
  %v2162 = vld [vmem:[%s2160] ss:$16 sm:%s2161]
  %vm2163 = vcmask 1047558
  %v2164 = vsel %vm2163, %v2162, %v2159
  %2165 = vrot.lane.b32.xlu0 %v2164, 12
  %v2166 = vpop.permute.xlu0 %2165
  %vm2167 = vcmask 130144
  %s2168 = scalar_lea.vmem %s1, 18
  %2169 = vst.msk [vmem:[%s2168] sm:$0x1f] %vm2167, %v2166
  %s2170 = scalar_lea.vmem %s1, 19
  %2171 = vst.msk [vmem:[%s2170] sm:$0xe0] %vm2167, %v2166
  %s2172 = scalar_lea.vmem %s0, 707
  %s2173 = smov 3
  %v2174 = vld [vmem:[%s2172] ss:$16 sm:%s2173]
  %s2175 = scalar_lea.vmem %s0, 707
  %s2176 = smov 12
  %v2177 = vld [vmem:[%s2175] ss:$16 sm:%s2176]
  %vm2178 = vcmask 1043458
  %v2179 = vsel %vm2178, %v2177, %v2174
  %s2180 = scalar_lea.vmem %s0, 767
  %v2181 = vld [vmem:[%s2180] sm:$0x10]
  %vm2182 = vcmask 1044484
  %v2183 = vsel %vm2182, %v2181, %v2179
  %s2184 = scalar_lea.vmem %s0, 307
  %s2185 = smov 96
  %v2186 = vld [vmem:[%s2184] ss:$16 sm:%s2185]
  %vm2187 = vcmask 1046533
  %v2188 = vsel %vm2187, %v2186, %v2183
  %s2189 = scalar_lea.vmem %s0, 412
  %v2190 = vld [vmem:[%s2189] sm:$0x80]
  %vm2191 = vcmask 1047559
  %v2192 = vsel %vm2191, %v2190, %v2188
  %2193 = vrot.lane.b32.xlu0 %v2192, 12
  %v2194 = vpop.permute.xlu0 %2193
  %vm2195 = vcmask 130144
  %s2196 = scalar_lea.vmem %s1, 50
  %2197 = vst.msk [vmem:[%s2196] sm:$0x1f] %vm2195, %v2194
  %s2198 = scalar_lea.vmem %s1, 22
  %2199 = vst.msk [vmem:[%s2198] sm:$0xe0] %vm2195, %v2194
  %s2200 = scalar_lea.vmem %s0, 435
  %v2201 = vld [vmem:[%s2200] sm:$0x1]
  %2202 = vrot.lane.b32.xlu0 %v2201, 12
  %v2203 = vpop.permute.xlu0 %2202
  %vm2204 = vcmask 130144
  %s2205 = scalar_lea.vmem %s1, 30
  %2206 = vst.msk [vmem:[%s2205] sm:$0x1] %vm2204, %v2203
  %s2207 = scalar_lea.vmem %s0, 2
  %s2208 = smov 3
  %v2209 = vld [vmem:[%s2207] ss:$16 sm:%s2208]
  %s2210 = scalar_lea.vmem %s0, 2
  %s2211 = smov 12
  %v2212 = vld [vmem:[%s2210] ss:$16 sm:%s2211]
  %vm2213 = vcmask 1043458
  %v2214 = vsel %vm2213, %v2212, %v2209
  %s2215 = scalar_lea.vmem %s0, 2
  %s2216 = smov 48
  %v2217 = vld [vmem:[%s2215] ss:$16 sm:%s2216]
  %vm2218 = vcmask 1045508
  %v2219 = vsel %vm2218, %v2217, %v2214
  %s2220 = scalar_lea.vmem %s0, 2
  %s2221 = smov 192
  %v2222 = vld [vmem:[%s2220] ss:$16 sm:%s2221]
  %vm2223 = vcmask 1047558
  %v2224 = vsel %vm2223, %v2222, %v2219
  %2225 = vrot.lane.b32.xlu0 %v2224, 8
  %v2226 = vpop.permute.xlu0 %2225
  %vm2227 = vcmask 97344
  %2228 = vst.msk [vmem:[%s1] sm:$0x7f] %vm2227, %v2226
  %s2229 = scalar_lea.vmem %s1, 1
  %2230 = vst.msk [vmem:[%s2229] sm:$0x80] %vm2227, %v2226
  %s2231 = scalar_lea.vmem %s0, 450
  %s2232 = smov 3
  %v2233 = vld [vmem:[%s2231] ss:$16 sm:%s2232]
  %s2234 = scalar_lea.vmem %s0, 450
  %s2235 = smov 12
  %v2236 = vld [vmem:[%s2234] ss:$16 sm:%s2235]
  %vm2237 = vcmask 1043458
  %v2238 = vsel %vm2237, %v2236, %v2233
  %s2239 = scalar_lea.vmem %s0, 450
  %s2240 = smov 48
  %v2241 = vld [vmem:[%s2239] ss:$16 sm:%s2240]
  %vm2242 = vcmask 1045508
  %v2243 = vsel %vm2242, %v2241, %v2238
  %s2244 = scalar_lea.vmem %s0, 450
  %s2245 = smov 192
  %v2246 = vld [vmem:[%s2244] ss:$16 sm:%s2245]
  %vm2247 = vcmask 1047558
  %v2248 = vsel %vm2247, %v2246, %v2243
  %2249 = vrot.lane.b32.xlu0 %v2248, 8
  %v2250 = vpop.permute.xlu0 %2249
  %vm2251 = vcmask 97344
  %s2252 = scalar_lea.vmem %s1, 32
  %2253 = vst.msk [vmem:[%s2252] sm:$0x7f] %vm2251, %v2250
  %s2254 = scalar_lea.vmem %s1, 33
  %2255 = vst.msk [vmem:[%s2254] sm:$0x80] %vm2251, %v2250
  %s2256 = scalar_lea.vmem %s0, 130
  %s2257 = smov 3
  %v2258 = vld [vmem:[%s2256] ss:$16 sm:%s2257]
  %s2259 = scalar_lea.vmem %s0, 130
  %s2260 = smov 12
  %v2261 = vld [vmem:[%s2259] ss:$16 sm:%s2260]
  %vm2262 = vcmask 1043458
  %v2263 = vsel %vm2262, %v2261, %v2258
  %s2264 = scalar_lea.vmem %s0, 130
  %s2265 = smov 48
  %v2266 = vld [vmem:[%s2264] ss:$16 sm:%s2265]
  %vm2267 = vcmask 1045508
  %v2268 = vsel %vm2267, %v2266, %v2263
  %s2269 = scalar_lea.vmem %s0, 130
  %s2270 = smov 192
  %v2271 = vld [vmem:[%s2269] ss:$16 sm:%s2270]
  %vm2272 = vcmask 1047558
  %v2273 = vsel %vm2272, %v2271, %v2268
  %2274 = vrot.lane.b32.xlu0 %v2273, 8
  %v2275 = vpop.permute.xlu0 %2274
  %vm2276 = vcmask 97344
  %s2277 = scalar_lea.vmem %s1, 9
  %2278 = vst.msk [vmem:[%s2277] sm:$0x3f] %vm2276, %v2275
  %s2279 = scalar_lea.vmem %s1, 10
  %2280 = vst.msk [vmem:[%s2279] sm:$0xc0] %vm2276, %v2275
  %s2281 = scalar_lea.vmem %s0, 578
  %s2282 = smov 3
  %v2283 = vld [vmem:[%s2281] ss:$16 sm:%s2282]
  %s2284 = scalar_lea.vmem %s0, 578
  %s2285 = smov 12
  %v2286 = vld [vmem:[%s2284] ss:$16 sm:%s2285]
  %vm2287 = vcmask 1043458
  %v2288 = vsel %vm2287, %v2286, %v2283
  %s2289 = scalar_lea.vmem %s0, 578
  %s2290 = smov 48
  %v2291 = vld [vmem:[%s2289] ss:$16 sm:%s2290]
  %vm2292 = vcmask 1045508
  %v2293 = vsel %vm2292, %v2291, %v2288
  %s2294 = scalar_lea.vmem %s0, 578
  %s2295 = smov 192
  %v2296 = vld [vmem:[%s2294] ss:$16 sm:%s2295]
  %vm2297 = vcmask 1047558
  %v2298 = vsel %vm2297, %v2296, %v2293
  %2299 = vrot.lane.b32.xlu0 %v2298, 8
  %v2300 = vpop.permute.xlu0 %2299
  %vm2301 = vcmask 97344
  %s2302 = scalar_lea.vmem %s1, 41
  %2303 = vst.msk [vmem:[%s2302] sm:$0x3f] %vm2301, %v2300
  %s2304 = scalar_lea.vmem %s1, 42
  %2305 = vst.msk [vmem:[%s2304] sm:$0xc0] %vm2301, %v2300
  %s2306 = scalar_lea.vmem %s0, 258
  %s2307 = smov 3
  %v2308 = vld [vmem:[%s2306] ss:$16 sm:%s2307]
  %s2309 = scalar_lea.vmem %s0, 258
  %s2310 = smov 12
  %v2311 = vld [vmem:[%s2309] ss:$16 sm:%s2310]
  %vm2312 = vcmask 1043458
  %v2313 = vsel %vm2312, %v2311, %v2308
  %s2314 = scalar_lea.vmem %s0, 258
  %s2315 = smov 48
  %v2316 = vld [vmem:[%s2314] ss:$16 sm:%s2315]
  %vm2317 = vcmask 1045508
  %v2318 = vsel %vm2317, %v2316, %v2313
  %s2319 = scalar_lea.vmem %s0, 258
  %s2320 = smov 192
  %v2321 = vld [vmem:[%s2319] ss:$16 sm:%s2320]
  %vm2322 = vcmask 1047558
  %v2323 = vsel %vm2322, %v2321, %v2318
  %2324 = vrot.lane.b32.xlu0 %v2323, 8
  %v2325 = vpop.permute.xlu0 %2324
  %vm2326 = vcmask 97344
  %s2327 = scalar_lea.vmem %s1, 18
  %2328 = vst.msk [vmem:[%s2327] sm:$0x1f] %vm2326, %v2325
  %s2329 = scalar_lea.vmem %s1, 19
  %2330 = vst.msk [vmem:[%s2329] sm:$0xe0] %vm2326, %v2325
  %s2331 = scalar_lea.vmem %s0, 706
  %s2332 = smov 3
  %v2333 = vld [vmem:[%s2331] ss:$16 sm:%s2332]
  %s2334 = scalar_lea.vmem %s0, 706
  %s2335 = smov 12
  %v2336 = vld [vmem:[%s2334] ss:$16 sm:%s2335]
  %vm2337 = vcmask 1043458
  %v2338 = vsel %vm2337, %v2336, %v2333
  %s2339 = scalar_lea.vmem %s0, 766
  %v2340 = vld [vmem:[%s2339] sm:$0x10]
  %vm2341 = vcmask 1044484
  %v2342 = vsel %vm2341, %v2340, %v2338
  %s2343 = scalar_lea.vmem %s0, 306
  %s2344 = smov 96
  %v2345 = vld [vmem:[%s2343] ss:$16 sm:%s2344]
  %vm2346 = vcmask 1046533
  %v2347 = vsel %vm2346, %v2345, %v2342
  %s2348 = scalar_lea.vmem %s0, 411
  %v2349 = vld [vmem:[%s2348] sm:$0x80]
  %vm2350 = vcmask 1047559
  %v2351 = vsel %vm2350, %v2349, %v2347
  %2352 = vrot.lane.b32.xlu0 %v2351, 8
  %v2353 = vpop.permute.xlu0 %2352
  %vm2354 = vcmask 97344
  %s2355 = scalar_lea.vmem %s1, 50
  %2356 = vst.msk [vmem:[%s2355] sm:$0x1f] %vm2354, %v2353
  %s2357 = scalar_lea.vmem %s1, 22
  %2358 = vst.msk [vmem:[%s2357] sm:$0xe0] %vm2354, %v2353
  %s2359 = scalar_lea.vmem %s0, 434
  %v2360 = vld [vmem:[%s2359] sm:$0x1]
  %2361 = vrot.lane.b32.xlu0 %v2360, 8
  %v2362 = vpop.permute.xlu0 %2361
  %vm2363 = vcmask 97344
  %s2364 = scalar_lea.vmem %s1, 30
  %2365 = vst.msk [vmem:[%s2364] sm:$0x1] %vm2363, %v2362
  %s2366 = scalar_lea.vmem %s0, 1
  %s2367 = smov 3
  %v2368 = vld [vmem:[%s2366] ss:$16 sm:%s2367]
  %s2369 = scalar_lea.vmem %s0, 1
  %s2370 = smov 12
  %v2371 = vld [vmem:[%s2369] ss:$16 sm:%s2370]
  %vm2372 = vcmask 1043458
  %v2373 = vsel %vm2372, %v2371, %v2368
  %s2374 = scalar_lea.vmem %s0, 1
  %s2375 = smov 48
  %v2376 = vld [vmem:[%s2374] ss:$16 sm:%s2375]
  %vm2377 = vcmask 1045508
  %v2378 = vsel %vm2377, %v2376, %v2373
  %s2379 = scalar_lea.vmem %s0, 1
  %s2380 = smov 192
  %v2381 = vld [vmem:[%s2379] ss:$16 sm:%s2380]
  %vm2382 = vcmask 1047558
  %v2383 = vsel %vm2382, %v2381, %v2378
  %2384 = vrot.lane.b32.xlu0 %v2383, 4
  %v2385 = vpop.permute.xlu0 %2384
  %vm2386 = vcmask 64544
  %2387 = vst.msk [vmem:[%s1] sm:$0x7f] %vm2386, %v2385
  %s2388 = scalar_lea.vmem %s1, 1
  %2389 = vst.msk [vmem:[%s2388] sm:$0x80] %vm2386, %v2385
  %s2390 = scalar_lea.vmem %s0, 449
  %s2391 = smov 3
  %v2392 = vld [vmem:[%s2390] ss:$16 sm:%s2391]
  %s2393 = scalar_lea.vmem %s0, 449
  %s2394 = smov 12
  %v2395 = vld [vmem:[%s2393] ss:$16 sm:%s2394]
  %vm2396 = vcmask 1043458
  %v2397 = vsel %vm2396, %v2395, %v2392
  %s2398 = scalar_lea.vmem %s0, 449
  %s2399 = smov 48
  %v2400 = vld [vmem:[%s2398] ss:$16 sm:%s2399]
  %vm2401 = vcmask 1045508
  %v2402 = vsel %vm2401, %v2400, %v2397
  %s2403 = scalar_lea.vmem %s0, 449
  %s2404 = smov 192
  %v2405 = vld [vmem:[%s2403] ss:$16 sm:%s2404]
  %vm2406 = vcmask 1047558
  %v2407 = vsel %vm2406, %v2405, %v2402
  %2408 = vrot.lane.b32.xlu0 %v2407, 4
  %v2409 = vpop.permute.xlu0 %2408
  %vm2410 = vcmask 64544
  %s2411 = scalar_lea.vmem %s1, 32
  %2412 = vst.msk [vmem:[%s2411] sm:$0x7f] %vm2410, %v2409
  %s2413 = scalar_lea.vmem %s1, 33
  %2414 = vst.msk [vmem:[%s2413] sm:$0x80] %vm2410, %v2409
  %s2415 = scalar_lea.vmem %s0, 129
  %s2416 = smov 3
  %v2417 = vld [vmem:[%s2415] ss:$16 sm:%s2416]
  %s2418 = scalar_lea.vmem %s0, 129
  %s2419 = smov 12
  %v2420 = vld [vmem:[%s2418] ss:$16 sm:%s2419]
  %vm2421 = vcmask 1043458
  %v2422 = vsel %vm2421, %v2420, %v2417
  %s2423 = scalar_lea.vmem %s0, 129
  %s2424 = smov 48
  %v2425 = vld [vmem:[%s2423] ss:$16 sm:%s2424]
  %vm2426 = vcmask 1045508
  %v2427 = vsel %vm2426, %v2425, %v2422
  %s2428 = scalar_lea.vmem %s0, 129
  %s2429 = smov 192
  %v2430 = vld [vmem:[%s2428] ss:$16 sm:%s2429]
  %vm2431 = vcmask 1047558
  %v2432 = vsel %vm2431, %v2430, %v2427
  %2433 = vrot.lane.b32.xlu0 %v2432, 4
  %v2434 = vpop.permute.xlu0 %2433
  %vm2435 = vcmask 64544
  %s2436 = scalar_lea.vmem %s1, 9
  %2437 = vst.msk [vmem:[%s2436] sm:$0x3f] %vm2435, %v2434
  %s2438 = scalar_lea.vmem %s1, 10
  %2439 = vst.msk [vmem:[%s2438] sm:$0xc0] %vm2435, %v2434
  %s2440 = scalar_lea.vmem %s0, 577
  %s2441 = smov 3
  %v2442 = vld [vmem:[%s2440] ss:$16 sm:%s2441]
  %s2443 = scalar_lea.vmem %s0, 577
  %s2444 = smov 12
  %v2445 = vld [vmem:[%s2443] ss:$16 sm:%s2444]
  %vm2446 = vcmask 1043458
  %v2447 = vsel %vm2446, %v2445, %v2442
  %s2448 = scalar_lea.vmem %s0, 577
  %s2449 = smov 48
  %v2450 = vld [vmem:[%s2448] ss:$16 sm:%s2449]
  %vm2451 = vcmask 1045508
  %v2452 = vsel %vm2451, %v2450, %v2447
  %s2453 = scalar_lea.vmem %s0, 577
  %s2454 = smov 192
  %v2455 = vld [vmem:[%s2453] ss:$16 sm:%s2454]
  %vm2456 = vcmask 1047558
  %v2457 = vsel %vm2456, %v2455, %v2452
  %2458 = vrot.lane.b32.xlu0 %v2457, 4
  %v2459 = vpop.permute.xlu0 %2458
  %vm2460 = vcmask 64544
  %s2461 = scalar_lea.vmem %s1, 41
  %2462 = vst.msk [vmem:[%s2461] sm:$0x3f] %vm2460, %v2459
  %s2463 = scalar_lea.vmem %s1, 42
  %2464 = vst.msk [vmem:[%s2463] sm:$0xc0] %vm2460, %v2459
  %s2465 = scalar_lea.vmem %s0, 257
  %s2466 = smov 3
  %v2467 = vld [vmem:[%s2465] ss:$16 sm:%s2466]
  %s2468 = scalar_lea.vmem %s0, 257
  %s2469 = smov 12
  %v2470 = vld [vmem:[%s2468] ss:$16 sm:%s2469]
  %vm2471 = vcmask 1043458
  %v2472 = vsel %vm2471, %v2470, %v2467
  %s2473 = scalar_lea.vmem %s0, 257
  %s2474 = smov 48
  %v2475 = vld [vmem:[%s2473] ss:$16 sm:%s2474]
  %vm2476 = vcmask 1045508
  %v2477 = vsel %vm2476, %v2475, %v2472
  %s2478 = scalar_lea.vmem %s0, 257
  %s2479 = smov 192
  %v2480 = vld [vmem:[%s2478] ss:$16 sm:%s2479]
  %vm2481 = vcmask 1047558
  %v2482 = vsel %vm2481, %v2480, %v2477
  %2483 = vrot.lane.b32.xlu0 %v2482, 4
  %v2484 = vpop.permute.xlu0 %2483
  %vm2485 = vcmask 64544
  %s2486 = scalar_lea.vmem %s1, 18
  %2487 = vst.msk [vmem:[%s2486] sm:$0x1f] %vm2485, %v2484
  %s2488 = scalar_lea.vmem %s1, 19
  %2489 = vst.msk [vmem:[%s2488] sm:$0xe0] %vm2485, %v2484
  %s2490 = scalar_lea.vmem %s0, 705
  %s2491 = smov 3
  %v2492 = vld [vmem:[%s2490] ss:$16 sm:%s2491]
  %s2493 = scalar_lea.vmem %s0, 705
  %s2494 = smov 12
  %v2495 = vld [vmem:[%s2493] ss:$16 sm:%s2494]
  %vm2496 = vcmask 1043458
  %v2497 = vsel %vm2496, %v2495, %v2492
  %s2498 = scalar_lea.vmem %s0, 765
  %v2499 = vld [vmem:[%s2498] sm:$0x10]
  %vm2500 = vcmask 1044484
  %v2501 = vsel %vm2500, %v2499, %v2497
  %s2502 = scalar_lea.vmem %s0, 305
  %s2503 = smov 96
  %v2504 = vld [vmem:[%s2502] ss:$16 sm:%s2503]
  %vm2505 = vcmask 1046533
  %v2506 = vsel %vm2505, %v2504, %v2501
  %s2507 = scalar_lea.vmem %s0, 410
  %v2508 = vld [vmem:[%s2507] sm:$0x80]
  %vm2509 = vcmask 1047559
  %v2510 = vsel %vm2509, %v2508, %v2506
  %2511 = vrot.lane.b32.xlu0 %v2510, 4
  %v2512 = vpop.permute.xlu0 %2511
  %vm2513 = vcmask 64544
  %s2514 = scalar_lea.vmem %s1, 50
  %2515 = vst.msk [vmem:[%s2514] sm:$0x1f] %vm2513, %v2512
  %s2516 = scalar_lea.vmem %s1, 22
  %2517 = vst.msk [vmem:[%s2516] sm:$0xe0] %vm2513, %v2512
  %s2518 = scalar_lea.vmem %s0, 433
  %v2519 = vld [vmem:[%s2518] sm:$0x1]
  %2520 = vrot.lane.b32.xlu0 %v2519, 4
  %v2521 = vpop.permute.xlu0 %2520
  %vm2522 = vcmask 64544
  %s2523 = scalar_lea.vmem %s1, 30
  %2524 = vst.msk [vmem:[%s2523] sm:$0x1] %vm2522, %v2521

// kernel: reparam_large_kernel_conv.1
$region0: #{reparam_large_kernel_conv.1}
  #allocation0 [shape = 'u32[]', space=smem, size = 0x4, offset = 0x4, fixed_abs, tag = 'smem constant byte address 0x4 - core index']
  #allocation1 [shape = 'u32[144,128]{1,0:T(1,128)}', space=vmem, size = 0x12000, scoped, tag = 'internal scratch']
  %s0 = inlined_call_operand.vmem [shape: f32[2,22,128], index: 0, kind: input, shape index: {}]
  %s1 = inlined_call_operand.vmem [shape: f32[7,7,128], index: 1, kind: input, shape index: {}]
  %s2 = inlined_call_operand.vmem [shape: f32[1,128], index: 2, kind: input, shape index: {}]
  %s3 = inlined_call_operand.vmem [shape: f32[2,16,128], index: 3, kind: output, shape index: {}]
  %s4 = sld [smem:[#allocation0]]
  $region52: #{reparam_large_kernel_conv.1} parent=0
    _
  %s6 = ssub.s32 1, %s4
  %s7 = scalar_select 0, %s6, %s4
  loop: start=0, step=1, limit=6
  $region2: #{reparam_large_kernel_conv.1} parent=0 // loop_pre_header
    _
  $region3: #{reparam_large_kernel_conv.1} parent=0 // loop_header
    %s9 = sphi 0, %s13
    %p10 = scmp.ge.s32.totalorder %s9, 6
    %s16 = sphi 0, %s28
    %s17 = sphi 0, %s24
    %s18 = sphi 0, %s16
    %s19 = sphi 0, %s17
    %s20 = sphi 0, %s18
    %s21 = sphi 0, %s19
    %s31 = sphi 0, %s33
    %s34 = sphi 0, %s31
    %s35 = sphi 0, %s34
    %s51 = sphi 0, %s35
    %s55 = sphi 0, %s55
    %s57 = sphi 0, %s55
    %s58 = sphi 0, %s57
    %s72 = sphi 0, %s58
    %s76 = sphi 0, %s76
    %s78 = sphi 0, %s76
    %s79 = sphi 0, %s78
    %s93 = sphi 0, %s79
    %s101 = sphi 0, %s103
    %s104 = sphi 0, %s101
    %s105 = sphi 0, %s104
    %s121 = sphi 0, %s105
  $region4: #{reparam_large_kernel_conv.1} parent=0 // loop_header_branch
    %12 = sbr.rel (%p10) target = $region8
  $region5: #{reparam_large_kernel_conv.1} parent=0 // loop_body
    %s14 = ssub.s32 %s9, 1
    %s15 = ssub.s32 %s9, 2
    %s22 = sadd.s32 1, %s17
    %p23 = scmp.ge.s32.totalorder %s22, 2
    %s24 = scalar_select %p23, 0, %s22
    %s25 = sadd.s32 1, %s16
    %s26 = scalar_select %p23, %s25, %s16
    %p27 = scmp.ge.s32.totalorder %s26, 2
    %s28 = scalar_select %p27, 0, %s26
    %s29 = ssub.s32 %s16, %s28
    %p30 = scmp.eq.s32.totalorder %s29, 0
    %s32 = sadd.s32 %s31, 1
    %s33 = scalar_select %p30, %s31, %s32
    %p36 = pneg %p30
    %p37 = scmp.eq.s32.totalorder %s9, 3
    %p38 = por %p36, %p37
    %p39 = scmp.ne.s32.totalorder %s31, %s34
    %p40 = scmp.eq.s32.totalorder %s9, 0
    %p41 = por %p39, %p40
    %p42 = scmp.ne.s32.totalorder %s31, %s34
    %p43 = scmp.eq.s32.totalorder %s14, 3
    %p44 = por %p42, %p43
    %p45 = scmp.ne.s32.totalorder %s34, %s35
    %p46 = scmp.eq.s32.totalorder %s14, 0
    %p47 = por %p45, %p46
    %p48 = scmp.ne.s32.totalorder %s34, %s35
    %p49 = scmp.eq.s32.totalorder %s15, 3
    %p50 = por %p48, %p49
    %p52 = scmp.ne.s32.totalorder %s35, %s51
    %p53 = scmp.eq.s32.totalorder %s15, 0
    %p54 = por %p52, %p53
    %s56 = sadd.s32 %s55, 1
    %p59 = scmp.eq.s32.totalorder %s9, 3
    %p60 = scmp.ne.s32.totalorder %s55, %s57
    %p61 = scmp.eq.s32.totalorder %s9, 0
    %p62 = por %p60, %p61
    %p63 = scmp.ne.s32.totalorder %s55, %s57
    %p64 = scmp.eq.s32.totalorder %s14, 3
    %p65 = por %p63, %p64
    %p66 = scmp.ne.s32.totalorder %s57, %s58
    %p67 = scmp.eq.s32.totalorder %s14, 0
    %p68 = por %p66, %p67
    %p69 = scmp.ne.s32.totalorder %s57, %s58
    %p70 = scmp.eq.s32.totalorder %s15, 3
    %p71 = por %p69, %p70
    %p73 = scmp.ne.s32.totalorder %s58, %s72
    %p74 = scmp.eq.s32.totalorder %s15, 0
    %p75 = por %p73, %p74
    %s77 = sadd.s32 %s76, 1
    %p80 = scmp.eq.s32.totalorder %s9, 3
    %p81 = scmp.ne.s32.totalorder %s76, %s78
    %p82 = scmp.eq.s32.totalorder %s9, 0
    %p83 = por %p81, %p82
    %p84 = scmp.ne.s32.totalorder %s76, %s78
    %p85 = scmp.eq.s32.totalorder %s14, 3
    %p86 = por %p84, %p85
    %p87 = scmp.ne.s32.totalorder %s78, %s79
    %p88 = scmp.eq.s32.totalorder %s14, 0
    %p89 = por %p87, %p88
    %p90 = scmp.ne.s32.totalorder %s78, %s79
    %p91 = scmp.eq.s32.totalorder %s15, 3
    %p92 = por %p90, %p91
    %p94 = scmp.ne.s32.totalorder %s79, %s93
    %p95 = scmp.eq.s32.totalorder %s15, 0
    %p96 = por %p94, %p95
    %s97 = ssub.s32 %s16, %s28
    %s98 = ssub.s32 %s17, %s24
    %s99 = sor.u32 %s97, %s98
    %p100 = scmp.eq.s32.totalorder %s99, 0
    %s102 = sadd.s32 %s101, 1
    %s103 = scalar_select %p100, %s101, %s102
    %p106 = pneg %p100
    %p107 = scmp.eq.s32.totalorder %s9, 3
    %p108 = por %p106, %p107
    %p109 = scmp.ne.s32.totalorder %s101, %s104
    %p110 = scmp.eq.s32.totalorder %s9, 0
    %p111 = por %p109, %p110
    %p112 = scmp.ne.s32.totalorder %s101, %s104
    %p113 = scmp.eq.s32.totalorder %s14, 3
    %p114 = por %p112, %p113
    %p115 = scmp.ne.s32.totalorder %s104, %s105
    %p116 = scmp.eq.s32.totalorder %s14, 0
    %p117 = por %p115, %p116
    %p118 = scmp.ne.s32.totalorder %s104, %s105
    %p119 = scmp.eq.s32.totalorder %s15, 3
    %p120 = por %p118, %p119
    %p122 = scmp.ne.s32.totalorder %s105, %s121
    %p123 = scmp.eq.s32.totalorder %s15, 0
    %p124 = por %p122, %p123
    %p125 = scmp.le.s32.totalorder 1, %s9
    %p126 = scmp.lt.s32.totalorder %s9, 5
    %p127 = pnand %p125, %p126
    %p128 = pneg %p127
    // Predicated region
    $region9: #{reparam_large_kernel_conv.1} parent=5 // pred_check
      _
    $region10: #{reparam_large_kernel_conv.1} parent=5 // pred_check_branch
      %130 = sbr.rel (%p127) target = $region12
    $region11: #{reparam_large_kernel_conv.1} parent=5 // pred_region
      %s131 = ssub.s32 %s9, 1
      // Predicated region
      $region13: #{reparam_large_kernel_conv.1} parent=11 // pred_check
        %p132 = pneg %p68
      $region14: #{reparam_large_kernel_conv.1} parent=11 // pred_check_branch
        %134 = sbr.rel (%p132) target = $region16
      $region15: #{reparam_large_kernel_conv.1} parent=11 // pred_region
        _
      $region16: #{reparam_large_kernel_conv.1} parent=11 // pred_fallthru
        _
      // Predicated region
      $region17: #{reparam_large_kernel_conv.1} parent=11 // pred_check
        %p135 = pneg %p89
      $region18: #{reparam_large_kernel_conv.1} parent=11 // pred_check_branch
        %137 = sbr.rel (%p135) target = $region20
      $region19: #{reparam_large_kernel_conv.1} parent=11 // pred_region
        _
      $region20: #{reparam_large_kernel_conv.1} parent=11 // pred_fallthru
        _
    $region12: #{reparam_large_kernel_conv.1} parent=5 // pred_fallthru
      _
    %p138 = scmp.lt.s32.totalorder %s9, 4
    // Predicated region
    $region21: #{reparam_large_kernel_conv.1} parent=5 // pred_check
      %p139 = pneg %p138
    $region22: #{reparam_large_kernel_conv.1} parent=5 // pred_check_branch
      %141 = sbr.rel (%p139) target = $region24
    $region23: #{reparam_large_kernel_conv.1} parent=5 // pred_region
      // Predicated region
      $region25: #{reparam_large_kernel_conv.1} parent=23 // pred_check
        %p142 = pneg %p41
      $region26: #{reparam_large_kernel_conv.1} parent=23 // pred_check_branch
        %144 = sbr.rel (%p142) target = $region28
      $region27: #{reparam_large_kernel_conv.1} parent=23 // pred_region
        %p145 = scmp.lt.s32.totalorder %s16, 1
        %s146 = scalar_select %p145, %s16, 1
        %s147 = smul.addr %s146, 3
        %s148 = smul.addr %s147, 8
        %s149 = scalar_lea.vmem %s0, %s148
      $region28: #{reparam_large_kernel_conv.1} parent=23 // pred_fallthru
        _
    $region24: #{reparam_large_kernel_conv.1} parent=5 // pred_fallthru
      _
    %p150 = scmp.le.s32.totalorder 1, %s9
    %p151 = scmp.lt.s32.totalorder %s9, 5
    %p152 = pnand %p150, %p151
    %p153 = pneg %p152
    // Predicated region
    $region29: #{reparam_large_kernel_conv.1} parent=5 // pred_check
      _
    $region30: #{reparam_large_kernel_conv.1} parent=5 // pred_check_branch
      %155 = sbr.rel (%p152) target = $region32
    $region31: #{reparam_large_kernel_conv.1} parent=5 // pred_region
      %s156 = ssub.s32 %s9, 1
      %p157 = scmp.lt.s32.totalorder %s18, 1
      %s158 = scalar_select %p157, %s18, 1
      %s159 = smul.addr %s158, 3
      %s160 = smul.addr %s159, 8
      %s161 = scalar_lea.vmem %s0, %s160
      %p162 = pneg %p47
      %p163 = pneg %p44
      %p164 = pneg %p68
      %p165 = pneg %p65
      %p166 = pneg %p89
      %p167 = pneg %p86
      %p168 = pneg %p117
      %p169 = pneg %p114
      %p170 = scmp.lt.s32.totalorder %s18, 1
      %s171 = scalar_select %p170, %s18, 1
      %p172 = scmp.lt.s32.totalorder %s19, 1
      %s173 = scalar_select %p172, %s19, 1
      %s174 = smul.addr %s171, 2
      %s175 = sadd.s32 %s173, %s174
      %s176 = smul.addr %s175, 8
      %s177 = scalar_lea.vmem %s3, %s176
      %p178 = scmp.lt.s32.totalorder %s18, 1
      %s179 = scalar_select %p178, %s18, 1
      %s180 = smul.addr %s179, 3
      %s181 = smul.addr %s180, 8
      %s182 = scalar_lea.vmem %s0, %s181
      %p183 = scmp.lt.s32.totalorder %s18, 1
      %s184 = scalar_select %p183, %s18, 1
      %p185 = scmp.lt.s32.totalorder %s19, 1
      %s186 = scalar_select %p185, %s19, 1
      %s187 = smul.addr %s184, 2
      %s188 = sadd.s32 %s186, %s187
      %s189 = smul.addr %s188, 8
      %s190 = scalar_lea.vmem %s3, %s189
      %s191 = smul.u32 %s19, 8
      loop: start=0, step=1, limit=7
      $region33: #{reparam_large_kernel_conv.1} parent=31 // loop_pre_header
        _
      $region34: #{reparam_large_kernel_conv.1} parent=31 // loop_header
        %s193 = sphi 0, %s197
        %p194 = scmp.ge.s32.totalorder %s193, 7
        %v198 = vphi 0.0, %v258
      $region35: #{reparam_large_kernel_conv.1} parent=31 // loop_header_branch
        %196 = sbr.rel (%p194) target = $region39
      $region36: #{reparam_large_kernel_conv.1} parent=31 // loop_body
        %s199 = sadd.s32 %s191, %s193
        %s200 = scalar_lea.vmem %s182, %s199
        %v201 = vld [vmem:[%s200] sm:$0xff]
        %s202 = smul.u32 %s193, 8
        %s203 = scalar_lea.vmem %s1, %s202
        %v204 = vld [vmem:[%s203] sm:$0x7f]
        %v205 = vlaneseq
        %v206 = vshrl.u32 %v205, 7
        %v207 = vsub.s32 0, %v206
        %v208 = vrot.slane %v204, %v207
        %v209 = vmul.f32 %v201, %v208
        %v210 = vadd.f32 %v198, %v209
        %211 = vrot.lane.b32.xlu0 %v201, 124
        %v212 = vpop.permute.xlu0 %211
        %v213 = vlaneseq
        %v214 = vshrl.u32 %v213, 7
        %v215 = vsub.s32 1, %v214
        %v216 = vrot.slane %v204, %v215
        %v217 = vmul.f32 %v212, %v216
        %v218 = vadd.f32 %v210, %v217
        %219 = vrot.lane.b32.xlu0 %v201, 120
        %v220 = vpop.permute.xlu0 %219
        %v221 = vlaneseq
        %v222 = vshrl.u32 %v221, 7
        %v223 = vsub.s32 2, %v222
        %v224 = vrot.slane %v204, %v223
        %v225 = vmul.f32 %v220, %v224
        %v226 = vadd.f32 %v218, %v225
        %227 = vrot.lane.b32.xlu0 %v201, 116
        %v228 = vpop.permute.xlu0 %227
        %v229 = vlaneseq
        %v230 = vshrl.u32 %v229, 7
        %v231 = vsub.s32 3, %v230
        %v232 = vrot.slane %v204, %v231
        %v233 = vmul.f32 %v228, %v232
        %v234 = vadd.f32 %v226, %v233
        %235 = vrot.lane.b32.xlu0 %v201, 112
        %v236 = vpop.permute.xlu0 %235
        %v237 = vlaneseq
        %v238 = vshrl.u32 %v237, 7
        %v239 = vsub.s32 4, %v238
        %v240 = vrot.slane %v204, %v239
        %v241 = vmul.f32 %v236, %v240
        %v242 = vadd.f32 %v234, %v241
        %243 = vrot.lane.b32.xlu0 %v201, 108
        %v244 = vpop.permute.xlu0 %243
        %v245 = vlaneseq
        %v246 = vshrl.u32 %v245, 7
        %v247 = vsub.s32 5, %v246
        %v248 = vrot.slane %v204, %v247
        %v249 = vmul.f32 %v244, %v248
        %v250 = vadd.f32 %v242, %v249
        %251 = vrot.lane.b32.xlu0 %v201, 104
        %v252 = vpop.permute.xlu0 %251
        %v253 = vlaneseq
        %v254 = vshrl.u32 %v253, 7
        %v255 = vsub.s32 6, %v254
        %v256 = vrot.slane %v204, %v255
        %v257 = vmul.f32 %v252, %v256
        %v258 = vadd.f32 %v250, %v257
      $region37: #{reparam_large_kernel_conv.1} parent=31 // loop_footer
        %s197 = sadd.s32 1, %s193
      $region38: #{reparam_large_kernel_conv.1} parent=31 // loop_footer_branch
        %192 = sbr.rel target = $region34
      $region39: #{reparam_large_kernel_conv.1} parent=31 // loop_exit
        _
      %v259 = vld [vmem:[%s2] sm:$0x1]
      %v261 = vlaneseq
      %v262 = vshrl.u32 %v261, 7
      %v263 = vsub.s32 0, %v262
      %v264 = vrot.slane %v259, %v263
      %v266 = vadd.f32 %v198, %v264
      %267 = vst [vmem:[%s190] sm:$0xff] %v266
      %p268 = scmp.lt.s32.totalorder %s18, 1
      %s269 = scalar_select %p268, %s18, 1
      %p270 = scmp.lt.s32.totalorder %s19, 1
      %s271 = scalar_select %p270, %s19, 1
      %s272 = smul.addr %s269, 2
      %s273 = sadd.s32 %s271, %s272
      %s274 = smul.addr %s273, 8
      %s275 = scalar_lea.vmem %s3, %s274
      // Predicated region
      $region40: #{reparam_large_kernel_conv.1} parent=31 // pred_check
        %p276 = pneg %p114
      $region41: #{reparam_large_kernel_conv.1} parent=31 // pred_check_branch
        %278 = sbr.rel (%p276) target = $region43
      $region42: #{reparam_large_kernel_conv.1} parent=31 // pred_region
        _
      $region43: #{reparam_large_kernel_conv.1} parent=31 // pred_fallthru
        _
    $region32: #{reparam_large_kernel_conv.1} parent=5 // pred_fallthru
      _
    %p279 = scmp.le.s32.totalorder 2, %s9
    // Predicated region
    $region44: #{reparam_large_kernel_conv.1} parent=5 // pred_check
      %p280 = pneg %p279
    $region45: #{reparam_large_kernel_conv.1} parent=5 // pred_check_branch
      %282 = sbr.rel (%p280) target = $region47
    $region46: #{reparam_large_kernel_conv.1} parent=5 // pred_region
      %s283 = ssub.s32 %s9, 2
      // Predicated region
      $region48: #{reparam_large_kernel_conv.1} parent=46 // pred_check
        %p284 = pneg %p120
      $region49: #{reparam_large_kernel_conv.1} parent=46 // pred_check_branch
        %286 = sbr.rel (%p284) target = $region51
      $region50: #{reparam_large_kernel_conv.1} parent=46 // pred_region
        %p287 = scmp.lt.s32.totalorder %s20, 1
        %s288 = scalar_select %p287, %s20, 1
        %p289 = scmp.lt.s32.totalorder %s21, 1
        %s290 = scalar_select %p289, %s21, 1
        %s291 = smul.addr %s288, 2
        %s292 = sadd.s32 %s290, %s291
        %s293 = smul.addr %s292, 8
        %s294 = scalar_lea.vmem %s3, %s293
      $region51: #{reparam_large_kernel_conv.1} parent=46 // pred_fallthru
        _
    $region47: #{reparam_large_kernel_conv.1} parent=5 // pred_fallthru
      _
  $region6: #{reparam_large_kernel_conv.1} parent=0 // loop_footer
    %s13 = sadd.s32 1, %s9
  $region7: #{reparam_large_kernel_conv.1} parent=0 // loop_footer_branch
    %8 = sbr.rel target = $region3
  $region8: #{reparam_large_kernel_conv.1} parent=0 // loop_exit
    _

</llo_original>
